<compile_context>
chip_gen: v7x
topology: tpu7x:2x2x1
jax: 0.10.0
libtpu: 0.0.40
codegen_flags: <defaults>
</compile_context>

<pallas_src>
import functools

import jax
import jax.numpy as jnp
from jax import lax
from jax.experimental import pallas as pl
from jax.experimental.pallas import tpu as pltpu


# ----------------------------------------------------------------------------
# small helpers
# ----------------------------------------------------------------------------
def _round_up(x, m):
    return ((x + m - 1) // m) * m


def _tile_and_pad(dim, align, max_tile):
    """Pick a tile (multiple of `align`, <= max_tile) and the padded extent it divides."""
    padded = _round_up(dim, align)
    tile = min(padded, max_tile)
    padded = _round_up(padded, tile)
    return tile, padded


_VMEM_LIMIT = 32 * 1024 * 1024   # fits v5e/v6e scoped default and v7x's 64 MiB physical


# ----------------------------------------------------------------------------
# Pallas kernel 1: tiled fused matmul + bias + activation
#   grid = (M/TM, N/TN, K/TK); f32 accumulator scratch; bf16 MXU operands.
# ----------------------------------------------------------------------------
def _matmul_bias_act_kernel(a_ref, w_ref, b_ref, o_ref, acc_ref, *, act):
    k = pl.program_id(2)

    @pl.when(k == 0)
    def _init():
        acc_ref[...] = jnp.zeros_like(acc_ref)

    acc_ref[...] += jnp.dot(a_ref[...], w_ref[...],
                            preferred_element_type=jnp.float32)

    @pl.when(k == pl.num_programs(2) - 1)
    def _finalize():
        out = acc_ref[...] + b_ref[...]          # (TM,TN) + (1,TN), f32 epilogue
        if act == "relu":
            out = jnp.maximum(out, 0.0)
        elif act == "tanh":
            out = jnp.tanh(out)
        o_ref[...] = out.astype(o_ref.dtype)


def matmul_bias_act(a, w, b, act, out_dtype):
    M, K = a.shape
    K2, N = w.shape
    assert K == K2

    TM, Mp = _tile_and_pad(M, 8, 256)      # sublane dim: multiple of 8
    TN, Np = _tile_and_pad(N, 128, 256)    # lane dim: multiple of 128
    TK, Kp = _tile_and_pad(K, 128, 512)

    a_p = jnp.pad(a.astype(jnp.bfloat16), ((0, Mp - M), (0, Kp - K)))
    w_p = jnp.pad(w.astype(jnp.bfloat16), ((0, Kp - K), (0, Np - N)))
    b_p = jnp.pad(b.astype(jnp.float32), ((0, Np - N),)).reshape(1, Np)

    grid = (Mp // TM, Np // TN, Kp // TK)
    kernel = functools.partial(_matmul_bias_act_kernel, act=act)

    out = pl.pallas_call(
        kernel,
        out_shape=jax.ShapeDtypeStruct((Mp, Np), out_dtype),
        grid=grid,
        in_specs=[
            pl.BlockSpec((TM, TK), lambda i, j, k: (i, k)),
            pl.BlockSpec((TK, TN), lambda i, j, k: (k, j)),
            pl.BlockSpec((1, TN), lambda i, j, k: (0, j)),
        ],
        out_specs=pl.BlockSpec((TM, TN), lambda i, j, k: (i, j)),
        scratch_shapes=[pltpu.VMEM((TM, TN), jnp.float32)],
        compiler_params=pltpu.CompilerParams(
            dimension_semantics=("parallel", "parallel", "arbitrary"),
            vmem_limit_bytes=_VMEM_LIMIT),
        cost_estimate=pl.CostEstimate(
            flops=2 * Mp * Np * Kp,
            transcendentals=Mp * Np if act == "tanh" else 0,
            bytes_accessed=(Mp * Kp * 2 + Kp * Np * 2
                            + Mp * Np * jnp.dtype(out_dtype).itemsize)),
    )(a_p, w_p, b_p)
    return out[:M, :N]


# ----------------------------------------------------------------------------
# Pallas kernel 2: vector quantization, tiled over rows of z.
#   distances (MXU, bf16) -> first-argmin -> one-hot (VMEM only) ->
#   quantized = one_hot @ codebook (f32) ; a (1,Kp) code-usage histogram and a
#   (1,128) sum-of-squared-error accumulator stay resident in VMEM so neither
#   the one-hot matrix nor a second pass over (q, z) ever hits HBM.
# ----------------------------------------------------------------------------
def _vq_kernel(z_ref, e_ref, esq_ref, q_ref, hist_ref, sse_ref,
               *, n_valid, tile_rows):
    i = pl.program_id(0)

    @pl.when(i == 0)
    def _init():
        hist_ref[...] = jnp.zeros_like(hist_ref)
        sse_ref[...] = jnp.zeros_like(sse_ref)

    z = z_ref[...]                                   # (TR, Dp) f32
    e = e_ref[...]                                   # (Kp, Dp) f32
    e_sq = esq_ref[...]                              # (1, Kp)  (+inf-like on padded codes)

    z_sq = jnp.sum(z * z, axis=1, keepdims=True)     # (TR, 1)
    ze = lax.dot_general(z.astype(jnp.bfloat16), e.astype(jnp.bfloat16),
                         (((1,), (1,)), ((), ())),
                         preferred_element_type=jnp.float32)    # (TR, Kp)
    dist = z_sq - 2.0 * ze + e_sq                    # (TR, Kp)

    Kp = dist.shape[1]
    min_d = jnp.min(dist, axis=1, keepdims=True)
    k_iota = lax.broadcasted_iota(jnp.int32, dist.shape, 1)
    # first index achieving the minimum (matches torch.argmin tie-breaking)
    idx = jnp.min(jnp.where(dist <= min_d, k_iota, Kp), axis=1, keepdims=True)
    one_hot = (k_iota == idx).astype(jnp.float32)    # (TR, Kp), VMEM only

    q = jnp.dot(one_hot, e, preferred_element_type=jnp.float32)  # (TR, Dp)
    q_ref[...] = q

    # mask rows that are only padding
    row = lax.broadcasted_iota(jnp.int32, (dist.shape[0], 1), 0) + i * tile_rows
    valid = (row < n_valid).astype(jnp.float32)      # (TR, 1)

    # code-usage histogram (resident output block)
    hist_ref[...] += jnp.sum(one_hot * valid, axis=0, keepdims=True)

    # sum of squared (q - z) over valid rows; padded D columns are 0 in both.
    diff = q - z
    row_sse = jnp.sum(diff * diff, axis=1, keepdims=True)         # (TR, 1)
    sse_ref[...] += jnp.sum(row_sse * valid)                      # scalar bcast to (1,128)


def vector_quantize(z_flat, codebook):
    N, D = z_flat.shape
    K, D2 = codebook.shape
    assert D == D2

    Dp = _round_up(D, 128)
    Kp = _round_up(K, 128)
    TR, Np = _tile_and_pad(N, 8, 512)

    z_p = jnp.pad(z_flat.astype(jnp.float32), ((0, Np - N), (0, Dp - D)))
    e_p = jnp.pad(codebook.astype(jnp.float32), ((0, Kp - K), (0, Dp - D)))
    e_sq = jnp.sum(e_p * e_p, axis=1)
    kmask = jnp.arange(Kp) < K
    e_sq = jnp.where(kmask, e_sq, 1e30).reshape(1, Kp).astype(jnp.float32)

    grid = (Np // TR,)
    kernel = functools.partial(_vq_kernel, n_valid=N, tile_rows=TR)

    q_pad, hist, sse = pl.pallas_call(
        kernel,
        out_shape=(
            jax.ShapeDtypeStruct((Np, Dp), jnp.float32),
            jax.ShapeDtypeStruct((1, Kp), jnp.float32),
            jax.ShapeDtypeStruct((1, 128), jnp.float32),
        ),
        grid=grid,
        in_specs=[
            pl.BlockSpec((TR, Dp), lambda i: (i, 0)),
            pl.BlockSpec((Kp, Dp), lambda i: (0, 0)),
            pl.BlockSpec((1, Kp), lambda i: (0, 0)),
        ],
        out_specs=(
            pl.BlockSpec((TR, Dp), lambda i: (i, 0)),
            pl.BlockSpec((1, Kp), lambda i: (0, 0)),
            pl.BlockSpec((1, 128), lambda i: (0, 0)),
        ),
        compiler_params=pltpu.CompilerParams(
            dimension_semantics=("arbitrary",),      # hist/sse reduce over this axis
            vmem_limit_bytes=_VMEM_LIMIT),
        cost_estimate=pl.CostEstimate(
            flops=4 * Np * Kp * Dp,
            transcendentals=0,
            bytes_accessed=(Np * Dp * 4 * 2 + Kp * Dp * 4 + Kp * 4 + 512)),
    )(z_p, e_p, e_sq)
    return q_pad[:N, :D], hist[0, :K], sse[0, 0]


# ----------------------------------------------------------------------------
# JAX glue: im2col (strided / fused-upsample variants), conv wrapper,
# parameter init, forward.
# ----------------------------------------------------------------------------
def _im2col(x_nhwc, stride):
    """3x3, padding=1 strided patch extraction. Returns (B*Ho*Wo, 9*C) + (B,Ho,Wo)."""
    # TODO(synk): patch construction still materializes a 9x-duplicated tensor in
    #   HBM (in bf16); a fully fused halo-DMA in-kernel im2col is the next step.
    B, H, W, C = x_nhwc.shape
    pad, k = 1, 3
    xp = jnp.pad(x_nhwc, ((0, 0), (pad, pad), (pad, pad), (0, 0)))
    Ho = (H + 2 * pad - k) // stride + 1
    Wo = (W + 2 * pad - k) // stride + 1
    patches = []
    for di in range(k):
        for dj in range(k):
            patches.append(
                xp[:, di:di + (Ho - 1) * stride + 1:stride,
                      dj:dj + (Wo - 1) * stride + 1:stride, :])
    p = jnp.concatenate(patches, axis=-1)            # (B, Ho, Wo, 9*C)
    return p.reshape(B * Ho * Wo, 9 * C), (B, Ho, Wo)


def _im2col_upsampled(x_nhwc, s):
    """Patches of conv3x3(pad=1, stride=1) applied to nearest-upsample(x, s),
    gathered directly from x (never materializes the s^2-larger image)."""
    B, H, W, C = x_nhwc.shape
    xp = jnp.pad(x_nhwc, ((0, 0), (1, 1), (1, 1), (0, 0)))   # zero halo on original
    Ho, Wo = H * s, W * s
    oy = jnp.arange(Ho)
    ox = jnp.arange(Wo)
    patches = []
    for di in range(3):
        for dj in range(3):
            # upsampled-padded coord c in [0, Ho+1] maps to padded-original row
            # (c-1)//s + 1 (floor div handles both zero-pad borders correctly).
            ry = (oy + di - 1) // s + 1
            cx = (ox + dj - 1) // s + 1
            patches.append(jnp.take(jnp.take(xp, ry, axis=1), cx, axis=2))
    p = jnp.concatenate(patches, axis=-1)            # (B, Ho, Wo, 9*C)
    return p.reshape(B * Ho * Wo, 9 * C), (B, Ho, Wo)


def conv3x3(x_nhwc, w_hwio, b, act, out_dtype, *, stride=1, upsample=1):
    """Conv2d(k=3, pad=1) via im2col + Pallas fused tiled matmul.
    If upsample > 1, a nearest-neighbour upsample is fused into the gather."""
    kh, kw, cin, cout = w_hwio.shape
    if upsample > 1:
        a, (B, Ho, Wo) = _im2col_upsampled(x_nhwc, upsample)
    else:
        a, (B, Ho, Wo) = _im2col(x_nhwc, stride)
    w_mat = w_hwio.reshape(kh * kw * cin, cout)      # (kh,kw,cin) ordering matches im2col
    out = matmul_bias_act(a, w_mat, b, act, out_dtype)
    return out.reshape(B, Ho, Wo, cout)


def init_params(key, down_cfg, up_cfg, codebook_size, dim):
    params = {"down_w": [], "down_b": [], "up_w": [], "up_b": []}
    for (cin, cout, _s) in down_cfg:
        key, kw = jax.random.split(key)
        params["down_w"].append(0.1 * jax.random.normal(kw, (3, 3, cin, cout), jnp.float32))
        params["down_b"].append(jnp.zeros((cout,), jnp.float32))
    for (cin, cout, _s) in up_cfg:
        key, kw = jax.random.split(key)
        params["up_w"].append(0.1 * jax.random.normal(kw, (3, 3, cin, cout), jnp.float32))
        params["up_b"].append(jnp.zeros((cout,), jnp.float32))
    key, kc = jax.random.split(key)
    params["codebook"] = jax.random.uniform(
        kc, (codebook_size, dim), jnp.float32,
        minval=-1.0 / codebook_size, maxval=1.0 / codebook_size)
    return params


def vqvae_forward(params, x_nchw, *, down_cfg, up_cfg, beta=0.25):
    x = jnp.transpose(x_nchw, (0, 2, 3, 1)).astype(jnp.float32)   # NCHW -> NHWC

    # ----- encoder (intermediate activations kept in bf16; z_e in f32) -----
    n_down = len(down_cfg)
    for li, (_cin, _cout, s) in enumerate(down_cfg):
        out_dtype = jnp.float32 if li == n_down - 1 else jnp.bfloat16
        x = conv3x3(x, params["down_w"][li], params["down_b"][li],
                    act="relu", out_dtype=out_dtype, stride=s)
    z_e = x                                                        # (B, h, w, D) f32
    B, h, w_, D = z_e.shape

    # ----- vector quantizer (Pallas kernel) -----
    z_flat = z_e.reshape(B * h * w_, D)
    q_flat, code_hist, sse = vector_quantize(z_flat, params["codebook"])

    # Forward values: mse(q, sg(z)) == mse(sg(q), z) == mean((q - z)^2).
    mse_qz = sse / (B * h * w_ * D)
    codebook_loss = mse_qz
    commitment_loss = mse_qz
    avg_probs = code_hist / (B * h * w_)
    perplexity = jnp.exp(-jnp.sum(avg_probs * jnp.log(avg_probs + 1e-10)))
    perplexity_loss = perplexity   # TODO(synk): exact perplexity-loss form unknown
    loss = codebook_loss + beta * commitment_loss

    # straight-through estimator (forward value == quantized)
    quantized = z_flat + lax.stop_gradient(q_flat - z_flat)
    y = quantized.reshape(B, h, w_, D)

    # ----- decoder (nearest-upsample fused into the conv's patch gather) -----
    n_up = len(up_cfg)
    for li, (_cin, _cout, s) in enumerate(up_cfg):
        act = "tanh" if li == n_up - 1 else "relu"
        out_dtype = jnp.float32 if li == n_up - 1 else jnp.bfloat16
        y = conv3x3(y, params["up_w"][li], params["up_b"][li],
                    act=act, out_dtype=out_dtype, upsample=s)

    x_recon = jnp.transpose(y, (0, 3, 1, 2))                       # NHWC -> NCHW
    return x_recon, codebook_loss, commitment_loss, perplexity_loss, loss


if __name__ == "__main__":
    # Small configuration consistent with the module's constructor signature.
    down_channels = ((4, 8, 2), (8, 8, 2))     # 16x16 -> 8x8 -> 4x4, D=8
    up_channels = ((8, 8, 2), (8, 4, 2))       # 4x4 -> 8x8 -> 16x16, back to 4 ch
    codebook_size = 16
    dim = 8
    beta = 0.25

    key = jax.random.PRNGKey(0)
    key, kx = jax.random.split(key)
    x = jax.random.normal(kx, (2, 4, 16, 16), jnp.float32)         # NCHW input

    params = init_params(key, down_channels, up_channels, codebook_size, dim)

    fwd = jax.jit(functools.partial(vqvae_forward,
                                    down_cfg=down_channels,
                                    up_cfg=up_channels,
                                    beta=beta))
    x_recon, cb_loss, cm_loss, ppl_loss, loss = fwd(params, x)
    jax.block_until_ready((x_recon, cb_loss, cm_loss, ppl_loss, loss))

    assert x_recon.shape == x.shape, x_recon.shape
    assert jnp.isfinite(loss), loss
    print("KERNEL_OK")
</pallas_src>

<mosaic_0001>
module attributes {stable_mosaic.version = 11 : i64} {
  func.func @_matmul_bias_act_kernel(%arg0: i32, %arg1: i32, %arg2: i32, %arg3: memref<128x128xbf16, #tpu.memory_space<vmem>>, %arg4: memref<128x128xbf16, #tpu.memory_space<vmem>>, %arg5: memref<1x128xf32, #tpu.memory_space<vmem>>, %arg6: memref<128x128xbf16, #tpu.memory_space<vmem>>, %arg7: memref<128x128xf32, #tpu.memory_space<vmem>>) attributes {dimension_semantics = [#tpu.dimension_semantics<parallel>, #tpu.dimension_semantics<parallel>, #tpu.dimension_semantics<arbitrary>], iteration_bounds = array<i64: 1, 1, 1>, scalar_prefetch = 0 : i64, scratch_operands = 1 : i64, tpu.core_type = #tpu.core_type<tc>, window_params = [{transform_indices = @transform_0, window_bounds = array<i64: 128, 128>}, {transform_indices = @transform_1, window_bounds = array<i64: 128, 128>}, {transform_indices = @transform_2, window_bounds = array<i64: 1, 128>}, {transform_indices = @transform_3, window_bounds = array<i64: 128, 128>}]} {
    %c0_i32 = arith.constant 0 : i32
    %0 = arith.cmpi eq, %arg2, %c0_i32 : i32
    %1 = arith.extui %0 : i1 to i32
    %c0_i32_0 = arith.constant 0 : i32
    %2 = arith.cmpi ne, %1, %c0_i32_0 : i32
    scf.if %2 {
      %cst_10 = arith.constant 0.000000e+00 : f32
      %12 = vector.broadcast %cst_10 : f32 to vector<128x128xf32>
      %c0_11 = arith.constant 0 : index
      %c0_12 = arith.constant 0 : index
      %13 = vector.load %arg7[%c0_11, %c0_12] : memref<128x128xf32, #tpu.memory_space<vmem>>, vector<128x128xf32>
      tpu.vector_store %arg7[%c0_11, %c0_12], %12 {strides = array<i32>} : memref<128x128xf32, #tpu.memory_space<vmem>>, vector<128x128xf32>,
    } else {
    }
    %c0 = arith.constant 0 : index
    %c0_1 = arith.constant 0 : index
    %3 = vector.load %arg7[%c0, %c0_1] : memref<128x128xf32, #tpu.memory_space<vmem>>, vector<128x128xf32>
    %c0_2 = arith.constant 0 : index
    %c0_3 = arith.constant 0 : index
    %4 = vector.load %arg3[%c0_2, %c0_3] : memref<128x128xbf16, #tpu.memory_space<vmem>>, vector<128x128xbf16>
    %c0_4 = arith.constant 0 : index
    %c0_5 = arith.constant 0 : index
    %5 = vector.load %arg4[%c0_4, %c0_5] : memref<128x128xbf16, #tpu.memory_space<vmem>>, vector<128x128xbf16>
    %cst = arith.constant dense<0.000000e+00> : vector<128x128xf32>
    %6 = tpu.matmul %4, %5, %cst {dimension_numbers = #tpu.dot_dimension_numbers<[1], [0], [0], [1], [0, 0, 1, 1], [], []>} : vector<128x128xbf16>, vector<128x128xbf16>, vector<128x128xf32> -> vector<128x128xf32>
    %7 = arith.addf %3, %6 : vector<128x128xf32>
    %c0_6 = arith.constant 0 : index
    %c0_7 = arith.constant 0 : index
    %8 = vector.load %arg7[%c0_6, %c0_7] : memref<128x128xf32, #tpu.memory_space<vmem>>, vector<128x128xf32>
    tpu.vector_store %arg7[%c0_6, %c0_7], %7 {strides = array<i32>} : memref<128x128xf32, #tpu.memory_space<vmem>>, vector<128x128xf32>,
    %c0_i32_8 = arith.constant 0 : i32
    %9 = arith.cmpi eq, %arg2, %c0_i32_8 : i32
    %10 = arith.extui %9 : i1 to i32
    %c0_i32_9 = arith.constant 0 : i32
    %11 = arith.cmpi ne, %10, %c0_i32_9 : i32
    scf.if %11 {
      %c0_10 = arith.constant 0 : index
      %c0_11 = arith.constant 0 : index
      %12 = vector.load %arg7[%c0_10, %c0_11] : memref<128x128xf32, #tpu.memory_space<vmem>>, vector<128x128xf32>
      %c0_12 = arith.constant 0 : index
      %c0_13 = arith.constant 0 : index
      %13 = vector.load %arg5[%c0_12, %c0_13] : memref<1x128xf32, #tpu.memory_space<vmem>>, vector<1x128xf32>
      %14 = vector.broadcast %13 : vector<1x128xf32> to vector<128x128xf32>
      %15 = arith.addf %12, %14 : vector<128x128xf32>
      %cst_14 = arith.constant 0.000000e+00 : f32
      %16 = vector.broadcast %cst_14 : f32 to vector<128x128xf32>
      %17 = arith.maximumf %15, %16 : vector<128x128xf32>
      %18 = arith.truncf %17 : vector<128x128xf32> to vector<128x128xbf16>
      %c0_15 = arith.constant 0 : index
      %c0_16 = arith.constant 0 : index
      %19 = vector.load %arg6[%c0_15, %c0_16] : memref<128x128xbf16, #tpu.memory_space<vmem>>, vector<128x128xbf16>
      tpu.vector_store %arg6[%c0_15, %c0_16], %18 {strides = array<i32>} : memref<128x128xbf16, #tpu.memory_space<vmem>>, vector<128x128xbf16>,
    } else {
    }
    return
  }
  func.func @transform_0(%arg0: i32, %arg1: i32, %arg2: i32) -> (i32, i32) {
    %c0_i32 = arith.constant 0 : i32
    return %arg0, %arg2 : i32, i32
  }
  func.func @transform_1(%arg0: i32, %arg1: i32, %arg2: i32) -> (i32, i32) {
    %c0_i32 = arith.constant 0 : i32
    return %arg2, %arg1 : i32, i32
  }
  func.func @transform_2(%arg0: i32, %arg1: i32, %arg2: i32) -> (i32, i32) {
    %c0_i32 = arith.constant 0 : i32
    %c0_i32_0 = arith.constant 0 : i32
    return %c0_i32, %arg1 : i32, i32
  }
  func.func @transform_3(%arg0: i32, %arg1: i32, %arg2: i32) -> (i32, i32) {
    %c0_i32 = arith.constant 0 : i32
    return %arg0, %arg1 : i32, i32
  }
}

module attributes {stable_mosaic.version = 11 : i64} {
  func.func @_matmul_bias_act_kernel(%arg0: i32, %arg1: i32, %arg2: i32, %arg3: memref<32x128xbf16, #tpu.memory_space<vmem>>, %arg4: memref<128x128xbf16, #tpu.memory_space<vmem>>, %arg5: memref<1x128xf32, #tpu.memory_space<vmem>>, %arg6: memref<32x128xf32, #tpu.memory_space<vmem>>, %arg7: memref<32x128xf32, #tpu.memory_space<vmem>>) attributes {dimension_semantics = [#tpu.dimension_semantics<parallel>, #tpu.dimension_semantics<parallel>, #tpu.dimension_semantics<arbitrary>], iteration_bounds = array<i64: 1, 1, 1>, scalar_prefetch = 0 : i64, scratch_operands = 1 : i64, tpu.core_type = #tpu.core_type<tc>, window_params = [{transform_indices = @transform_0, window_bounds = array<i64: 32, 128>}, {transform_indices = @transform_1, window_bounds = array<i64: 128, 128>}, {transform_indices = @transform_2, window_bounds = array<i64: 1, 128>}, {transform_indices = @transform_3, window_bounds = array<i64: 32, 128>}]} {
    %c0_i32 = arith.constant 0 : i32
    %0 = arith.cmpi eq, %arg2, %c0_i32 : i32
    %1 = arith.extui %0 : i1 to i32
    %c0_i32_0 = arith.constant 0 : i32
    %2 = arith.cmpi ne, %1, %c0_i32_0 : i32
    scf.if %2 {
      %cst_10 = arith.constant 0.000000e+00 : f32
      %12 = vector.broadcast %cst_10 : f32 to vector<32x128xf32>
      %c0_11 = arith.constant 0 : index
      %c0_12 = arith.constant 0 : index
      %13 = vector.load %arg7[%c0_11, %c0_12] : memref<32x128xf32, #tpu.memory_space<vmem>>, vector<32x128xf32>
      tpu.vector_store %arg7[%c0_11, %c0_12], %12 {strides = array<i32>} : memref<32x128xf32, #tpu.memory_space<vmem>>, vector<32x128xf32>,
    } else {
    }
    %c0 = arith.constant 0 : index
    %c0_1 = arith.constant 0 : index
    %3 = vector.load %arg7[%c0, %c0_1] : memref<32x128xf32, #tpu.memory_space<vmem>>, vector<32x128xf32>
    %c0_2 = arith.constant 0 : index
    %c0_3 = arith.constant 0 : index
    %4 = vector.load %arg3[%c0_2, %c0_3] : memref<32x128xbf16, #tpu.memory_space<vmem>>, vector<32x128xbf16>
    %c0_4 = arith.constant 0 : index
    %c0_5 = arith.constant 0 : index
    %5 = vector.load %arg4[%c0_4, %c0_5] : memref<128x128xbf16, #tpu.memory_space<vmem>>, vector<128x128xbf16>
    %cst = arith.constant dense<0.000000e+00> : vector<32x128xf32>
    %6 = tpu.matmul %4, %5, %cst {dimension_numbers = #tpu.dot_dimension_numbers<[1], [0], [0], [1], [0, 0, 1, 1], [], []>} : vector<32x128xbf16>, vector<128x128xbf16>, vector<32x128xf32> -> vector<32x128xf32>
    %7 = arith.addf %3, %6 : vector<32x128xf32>
    %c0_6 = arith.constant 0 : index
    %c0_7 = arith.constant 0 : index
    %8 = vector.load %arg7[%c0_6, %c0_7] : memref<32x128xf32, #tpu.memory_space<vmem>>, vector<32x128xf32>
    tpu.vector_store %arg7[%c0_6, %c0_7], %7 {strides = array<i32>} : memref<32x128xf32, #tpu.memory_space<vmem>>, vector<32x128xf32>,
    %c0_i32_8 = arith.constant 0 : i32
    %9 = arith.cmpi eq, %arg2, %c0_i32_8 : i32
    %10 = arith.extui %9 : i1 to i32
    %c0_i32_9 = arith.constant 0 : i32
    %11 = arith.cmpi ne, %10, %c0_i32_9 : i32
    scf.if %11 {
      %c0_10 = arith.constant 0 : index
      %c0_11 = arith.constant 0 : index
      %12 = vector.load %arg7[%c0_10, %c0_11] : memref<32x128xf32, #tpu.memory_space<vmem>>, vector<32x128xf32>
      %c0_12 = arith.constant 0 : index
      %c0_13 = arith.constant 0 : index
      %13 = vector.load %arg5[%c0_12, %c0_13] : memref<1x128xf32, #tpu.memory_space<vmem>>, vector<1x128xf32>
      %14 = vector.broadcast %13 : vector<1x128xf32> to vector<32x128xf32>
      %15 = arith.addf %12, %14 : vector<32x128xf32>
      %cst_14 = arith.constant 0.000000e+00 : f32
      %16 = vector.broadcast %cst_14 : f32 to vector<32x128xf32>
      %17 = arith.maximumf %15, %16 : vector<32x128xf32>
      %c0_15 = arith.constant 0 : index
      %c0_16 = arith.constant 0 : index
      %18 = vector.load %arg6[%c0_15, %c0_16] : memref<32x128xf32, #tpu.memory_space<vmem>>, vector<32x128xf32>
      tpu.vector_store %arg6[%c0_15, %c0_16], %17 {strides = array<i32>} : memref<32x128xf32, #tpu.memory_space<vmem>>, vector<32x128xf32>,
    } else {
    }
    return
  }
  func.func @transform_0(%arg0: i32, %arg1: i32, %arg2: i32) -> (i32, i32) {
    %c0_i32 = arith.constant 0 : i32
    return %arg0, %arg2 : i32, i32
  }
  func.func @transform_1(%arg0: i32, %arg1: i32, %arg2: i32) -> (i32, i32) {
    %c0_i32 = arith.constant 0 : i32
    return %arg2, %arg1 : i32, i32
  }
  func.func @transform_2(%arg0: i32, %arg1: i32, %arg2: i32) -> (i32, i32) {
    %c0_i32 = arith.constant 0 : i32
    %c0_i32_0 = arith.constant 0 : i32
    return %c0_i32, %arg1 : i32, i32
  }
  func.func @transform_3(%arg0: i32, %arg1: i32, %arg2: i32) -> (i32, i32) {
    %c0_i32 = arith.constant 0 : i32
    return %arg0, %arg1 : i32, i32
  }
}

module attributes {stable_mosaic.version = 11 : i64} {
  func.func @_vq_kernel(%arg0: i32, %arg1: memref<32x128xf32, #tpu.memory_space<vmem>>, %arg2: memref<128x128xf32, #tpu.memory_space<vmem>>, %arg3: memref<1x128xf32, #tpu.memory_space<vmem>>, %arg4: memref<32x128xf32, #tpu.memory_space<vmem>>, %arg5: memref<1x128xf32, #tpu.memory_space<vmem>>, %arg6: memref<1x128xf32, #tpu.memory_space<vmem>>) attributes {dimension_semantics = [#tpu.dimension_semantics<arbitrary>], iteration_bounds = array<i64: 1>, scalar_prefetch = 0 : i64, scratch_operands = 0 : i64, tpu.core_type = #tpu.core_type<tc>, window_params = [{transform_indices = @transform_0, window_bounds = array<i64: 32, 128>}, {pipeline_mode = #tpu.pipeline_mode<synchronous>, transform_indices = @transform_1, window_bounds = array<i64: 128, 128>}, {pipeline_mode = #tpu.pipeline_mode<synchronous>, transform_indices = @transform_2, window_bounds = array<i64: 1, 128>}, {transform_indices = @transform_3, window_bounds = array<i64: 32, 128>}, {pipeline_mode = #tpu.pipeline_mode<synchronous>, transform_indices = @transform_4, window_bounds = array<i64: 1, 128>}, {pipeline_mode = #tpu.pipeline_mode<synchronous>, transform_indices = @transform_5, window_bounds = array<i64: 1, 128>}]} {
    %c0_i32 = arith.constant 0 : i32
    %0 = arith.cmpi eq, %arg0, %c0_i32 : i32
    %1 = arith.extui %0 : i1 to i32
    %c0_i32_0 = arith.constant 0 : i32
    %2 = arith.cmpi ne, %1, %c0_i32_0 : i32
    scf.if %2 {
      %cst_25 = arith.constant 0.000000e+00 : f32
      %61 = vector.broadcast %cst_25 : f32 to vector<1x128xf32>
      %c0_26 = arith.constant 0 : index
      %c0_27 = arith.constant 0 : index
      %62 = vector.load %arg5[%c0_26, %c0_27] : memref<1x128xf32, #tpu.memory_space<vmem>>, vector<1x128xf32>
      tpu.vector_store %arg5[%c0_26, %c0_27], %61 {strides = array<i32>} : memref<1x128xf32, #tpu.memory_space<vmem>>, vector<1x128xf32>,
      %cst_28 = arith.constant 0.000000e+00 : f32
      %63 = vector.broadcast %cst_28 : f32 to vector<1x128xf32>
      %c0_29 = arith.constant 0 : index
      %c0_30 = arith.constant 0 : index
      %64 = vector.load %arg6[%c0_29, %c0_30] : memref<1x128xf32, #tpu.memory_space<vmem>>, vector<1x128xf32>
      tpu.vector_store %arg6[%c0_29, %c0_30], %63 {strides = array<i32>} : memref<1x128xf32, #tpu.memory_space<vmem>>, vector<1x128xf32>,
    } else {
    }
    %c0 = arith.constant 0 : index
    %c0_1 = arith.constant 0 : index
    %3 = vector.load %arg1[%c0, %c0_1] : memref<32x128xf32, #tpu.memory_space<vmem>>, vector<32x128xf32>
    %c0_2 = arith.constant 0 : index
    %c0_3 = arith.constant 0 : index
    %4 = vector.load %arg2[%c0_2, %c0_3] : memref<128x128xf32, #tpu.memory_space<vmem>>, vector<128x128xf32>
    %c0_4 = arith.constant 0 : index
    %c0_5 = arith.constant 0 : index
    %5 = vector.load %arg3[%c0_4, %c0_5] : memref<1x128xf32, #tpu.memory_space<vmem>>, vector<1x128xf32>
    %6 = arith.mulf %3, %3 : vector<32x128xf32>
    %cst = arith.constant dense<0.000000e+00> : vector<32xf32>
    %7 = vector.multi_reduction <add>, %6, %cst [1] : vector<32x128xf32> to vector<32xf32>
    %8 = vector.shape_cast %7 : vector<32xf32> to vector<32x1xf32>
    %9 = arith.truncf %3 : vector<32x128xf32> to vector<32x128xbf16>
    %10 = arith.truncf %4 : vector<128x128xf32> to vector<128x128xbf16>
    %cst_6 = arith.constant dense<0.000000e+00> : vector<32x128xf32>
    %11 = tpu.matmul %9, %10, %cst_6 {dimension_numbers = #tpu.dot_dimension_numbers<[1], [1], [0], [0], [0, 0, 1, 0], [], []>} : vector<32x128xbf16>, vector<128x128xbf16>, vector<32x128xf32> -> vector<32x128xf32>
    %cst_7 = arith.constant 2.000000e+00 : f32
    %12 = vector.broadcast %cst_7 : f32 to vector<32x128xf32>
    %13 = arith.mulf %12, %11 : vector<32x128xf32>
    %14 = vector.broadcast %8 : vector<32x1xf32> to vector<32x128xf32>
    %15 = arith.subf %14, %13 : vector<32x128xf32>
    %16 = vector.broadcast %5 : vector<1x128xf32> to vector<32x128xf32>
    %17 = arith.addf %15, %16 : vector<32x128xf32>
    %cst_8 = arith.constant dense<0x7F800000> : vector<32xf32>
    %18 = vector.multi_reduction <minimumf>, %17, %cst_8 [1] : vector<32x128xf32> to vector<32xf32>
    %19 = vector.shape_cast %18 : vector<32xf32> to vector<32x1xf32>
    %20 = tpu.iota {dimensions = array<i32: 1>} : vector<32x128xi32>
    %21 = vector.broadcast %19 : vector<32x1xf32> to vector<32x128xf32>
    %22 = arith.cmpf ole, %17, %21 : vector<32x128xf32>
    %c128_i32 = arith.constant 128 : i32
    %23 = vector.broadcast %c128_i32 : i32 to vector<32x128xi32>
    %24 = arith.select %22, %20, %23 : vector<32x128xi1>, vector<32x128xi32>
    %cst_9 = arith.constant dense<2147483647> : vector<32xi32>
    %25 = vector.multi_reduction <minsi>, %24, %cst_9 [1] : vector<32x128xi32> to vector<32xi32>
    %26 = vector.shape_cast %25 : vector<32xi32> to vector<32x1xi32>
    %27 = vector.broadcast %26 : vector<32x1xi32> to vector<32x128xi32>
    %28 = arith.cmpi eq, %20, %27 : vector<32x128xi32>
    %29 = arith.extui %28 : vector<32x128xi1> to vector<32x128xi32>
    %30 = arith.sitofp %29 : vector<32x128xi32> to vector<32x128xf32>
    %cst_10 = arith.constant dense<0.000000e+00> : vector<32x128xf32>
    %31 = tpu.matmul %30, %4, %cst_10 {dimension_numbers = #tpu.dot_dimension_numbers<[1], [0], [0], [1], [0, 0, 1, 1], [], []>} : vector<32x128xf32>, vector<128x128xf32>, vector<32x128xf32> -> vector<32x128xf32>
    %c0_11 = arith.constant 0 : index
    %c0_12 = arith.constant 0 : index
    %32 = vector.load %arg4[%c0_11, %c0_12] : memref<32x128xf32, #tpu.memory_space<vmem>>, vector<32x128xf32>
    tpu.vector_store %arg4[%c0_11, %c0_12], %31 {strides = array<i32>} : memref<32x128xf32, #tpu.memory_space<vmem>>, vector<32x128xf32>,
    %33 = tpu.iota {dimensions = array<i32: 0>} : vector<32x1xi32>
    %c32_i32 = arith.constant 32 : i32
    %34 = arith.muli %arg0, %c32_i32 : i32
    %35 = vector.broadcast %34 : i32 to vector<32x1xi32>
    %36 = arith.addi %33, %35 : vector<32x1xi32>
    %c32_i32_13 = arith.constant 32 : i32
    %37 = vector.broadcast %c32_i32_13 : i32 to vector<32x1xi32>
    %38 = arith.cmpi slt, %36, %37 : vector<32x1xi32>
    %39 = arith.extui %38 : vector<32x1xi1> to vector<32x1xi32>
    %40 = arith.sitofp %39 : vector<32x1xi32> to vector<32x1xf32>
    %c0_14 = arith.constant 0 : index
    %c0_15 = arith.constant 0 : index
    %41 = vector.load %arg5[%c0_14, %c0_15] : memref<1x128xf32, #tpu.memory_space<vmem>>, vector<1x128xf32>
    %42 = vector.broadcast %40 : vector<32x1xf32> to vector<32x128xf32>
    %43 = arith.mulf %30, %42 : vector<32x128xf32>
    %cst_16 = arith.constant dense<0.000000e+00> : vector<128xf32>
    %44 = vector.multi_reduction <add>, %43, %cst_16 [0] : vector<32x128xf32> to vector<128xf32>
    %45 = vector.shape_cast %44 : vector<128xf32> to vector<1x128xf32>
    %46 = arith.addf %41, %45 : vector<1x128xf32>
    %c0_17 = arith.constant 0 : index
    %c0_18 = arith.constant 0 : index
    %47 = vector.load %arg5[%c0_17, %c0_18] : memref<1x128xf32, #tpu.memory_space<vmem>>, vector<1x128xf32>
    tpu.vector_store %arg5[%c0_17, %c0_18], %46 {strides = array<i32>} : memref<1x128xf32, #tpu.memory_space<vmem>>, vector<1x128xf32>,
    %48 = arith.subf %31, %3 : vector<32x128xf32>
    %49 = arith.mulf %48, %48 : vector<32x128xf32>
    %cst_19 = arith.constant dense<0.000000e+00> : vector<32xf32>
    %50 = vector.multi_reduction <add>, %49, %cst_19 [1] : vector<32x128xf32> to vector<32xf32>
    %51 = vector.shape_cast %50 : vector<32xf32> to vector<32x1xf32>
    %c0_20 = arith.constant 0 : index
    %c0_21 = arith.constant 0 : index
    %52 = vector.load %arg6[%c0_20, %c0_21] : memref<1x128xf32, #tpu.memory_space<vmem>>, vector<1x128xf32>
    %53 = arith.mulf %51, %40 : vector<32x1xf32>
    %54 = vector.shape_cast %53 : vector<32x1xf32> to vector<1x32x1xf32>
    %cst_22 = arith.constant dense<0.000000e+00> : vector<1xf32>
    %55 = vector.multi_reduction <add>, %54, %cst_22 [1, 2] : vector<1x32x1xf32> to vector<1xf32>
    %56 = vector.shape_cast %55 : vector<1xf32> to vector<1x1x1xf32>
    %57 = vector.extract %56[0, 0, 0] : f32 from vector<1x1x1xf32>
    %58 = vector.broadcast %57 : f32 to vector<1x128xf32>
    %59 = arith.addf %52, %58 : vector<1x128xf32>
    %c0_23 = arith.constant 0 : index
    %c0_24 = arith.constant 0 : index
    %60 = vector.load %arg6[%c0_23, %c0_24] : memref<1x128xf32, #tpu.memory_space<vmem>>, vector<1x128xf32>
    tpu.vector_store %arg6[%c0_23, %c0_24], %59 {strides = array<i32>} : memref<1x128xf32, #tpu.memory_space<vmem>>, vector<1x128xf32>,
    return
  }
  func.func @transform_0(%arg0: i32) -> (i32, i32) {
    %c0_i32 = arith.constant 0 : i32
    %c0_i32_0 = arith.constant 0 : i32
    return %arg0, %c0_i32 : i32, i32
  }
  func.func @transform_1(%arg0: i32) -> (i32, i32) {
    %c0_i32 = arith.constant 0 : i32
    %c0_i32_0 = arith.constant 0 : i32
    %c0_i32_1 = arith.constant 0 : i32
    return %c0_i32, %c0_i32_0 : i32, i32
  }
  func.func @transform_2(%arg0: i32) -> (i32, i32) {
    %c0_i32 = arith.constant 0 : i32
    %c0_i32_0 = arith.constant 0 : i32
    %c0_i32_1 = arith.constant 0 : i32
    return %c0_i32, %c0_i32_0 : i32, i32
  }
  func.func @transform_3(%arg0: i32) -> (i32, i32) {
    %c0_i32 = arith.constant 0 : i32
    %c0_i32_0 = arith.constant 0 : i32
    return %arg0, %c0_i32 : i32, i32
  }
  func.func @transform_4(%arg0: i32) -> (i32, i32) {
    %c0_i32 = arith.constant 0 : i32
    %c0_i32_0 = arith.constant 0 : i32
    %c0_i32_1 = arith.constant 0 : i32
    return %c0_i32, %c0_i32_0 : i32, i32
  }
  func.func @transform_5(%arg0: i32) -> (i32, i32) {
    %c0_i32 = arith.constant 0 : i32
    %c0_i32_0 = arith.constant 0 : i32
    %c0_i32_1 = arith.constant 0 : i32
    return %c0_i32, %c0_i32_0 : i32, i32
  }
}

module attributes {stable_mosaic.version = 11 : i64} {
  func.func @_matmul_bias_act_kernel(%arg0: i32, %arg1: i32, %arg2: i32, %arg3: memref<256x128xbf16, #tpu.memory_space<vmem>>, %arg4: memref<128x128xbf16, #tpu.memory_space<vmem>>, %arg5: memref<1x128xf32, #tpu.memory_space<vmem>>, %arg6: memref<256x128xf32, #tpu.memory_space<vmem>>, %arg7: memref<256x128xf32, #tpu.memory_space<vmem>>) attributes {dimension_semantics = [#tpu.dimension_semantics<parallel>, #tpu.dimension_semantics<parallel>, #tpu.dimension_semantics<arbitrary>], iteration_bounds = array<i64: 2, 1, 1>, scalar_prefetch = 0 : i64, scratch_operands = 1 : i64, tpu.core_type = #tpu.core_type<tc>, window_params = [{transform_indices = @transform_0, window_bounds = array<i64: 256, 128>}, {transform_indices = @transform_1, window_bounds = array<i64: 128, 128>}, {transform_indices = @transform_2, window_bounds = array<i64: 1, 128>}, {transform_indices = @transform_3, window_bounds = array<i64: 256, 128>}]} {
    %c0_i32 = arith.constant 0 : i32
    %0 = arith.cmpi eq, %arg2, %c0_i32 : i32
    %1 = arith.extui %0 : i1 to i32
    %c0_i32_0 = arith.constant 0 : i32
    %2 = arith.cmpi ne, %1, %c0_i32_0 : i32
    scf.if %2 {
      %cst_10 = arith.constant 0.000000e+00 : f32
      %12 = vector.broadcast %cst_10 : f32 to vector<256x128xf32>
      %c0_11 = arith.constant 0 : index
      %c0_12 = arith.constant 0 : index
      %13 = vector.load %arg7[%c0_11, %c0_12] : memref<256x128xf32, #tpu.memory_space<vmem>>, vector<256x128xf32>
      tpu.vector_store %arg7[%c0_11, %c0_12], %12 {strides = array<i32>} : memref<256x128xf32, #tpu.memory_space<vmem>>, vector<256x128xf32>,
    } else {
    }
    %c0 = arith.constant 0 : index
    %c0_1 = arith.constant 0 : index
    %3 = vector.load %arg7[%c0, %c0_1] : memref<256x128xf32, #tpu.memory_space<vmem>>, vector<256x128xf32>
    %c0_2 = arith.constant 0 : index
    %c0_3 = arith.constant 0 : index
    %4 = vector.load %arg3[%c0_2, %c0_3] : memref<256x128xbf16, #tpu.memory_space<vmem>>, vector<256x128xbf16>
    %c0_4 = arith.constant 0 : index
    %c0_5 = arith.constant 0 : index
    %5 = vector.load %arg4[%c0_4, %c0_5] : memref<128x128xbf16, #tpu.memory_space<vmem>>, vector<128x128xbf16>
    %cst = arith.constant dense<0.000000e+00> : vector<256x128xf32>
    %6 = tpu.matmul %4, %5, %cst {dimension_numbers = #tpu.dot_dimension_numbers<[1], [0], [0], [1], [0, 0, 1, 1], [], []>} : vector<256x128xbf16>, vector<128x128xbf16>, vector<256x128xf32> -> vector<256x128xf32>
    %7 = arith.addf %3, %6 : vector<256x128xf32>
    %c0_6 = arith.constant 0 : index
    %c0_7 = arith.constant 0 : index
    %8 = vector.load %arg7[%c0_6, %c0_7] : memref<256x128xf32, #tpu.memory_space<vmem>>, vector<256x128xf32>
    tpu.vector_store %arg7[%c0_6, %c0_7], %7 {strides = array<i32>} : memref<256x128xf32, #tpu.memory_space<vmem>>, vector<256x128xf32>,
    %c0_i32_8 = arith.constant 0 : i32
    %9 = arith.cmpi eq, %arg2, %c0_i32_8 : i32
    %10 = arith.extui %9 : i1 to i32
    %c0_i32_9 = arith.constant 0 : i32
    %11 = arith.cmpi ne, %10, %c0_i32_9 : i32
    scf.if %11 {
      %c0_10 = arith.constant 0 : index
      %c0_11 = arith.constant 0 : index
      %12 = vector.load %arg7[%c0_10, %c0_11] : memref<256x128xf32, #tpu.memory_space<vmem>>, vector<256x128xf32>
      %c0_12 = arith.constant 0 : index
      %c0_13 = arith.constant 0 : index
      %13 = vector.load %arg5[%c0_12, %c0_13] : memref<1x128xf32, #tpu.memory_space<vmem>>, vector<1x128xf32>
      %14 = vector.broadcast %13 : vector<1x128xf32> to vector<256x128xf32>
      %15 = arith.addf %12, %14 : vector<256x128xf32>
      %16 = math.tanh %15 : vector<256x128xf32>
      %c0_14 = arith.constant 0 : index
      %c0_15 = arith.constant 0 : index
      %17 = vector.load %arg6[%c0_14, %c0_15] : memref<256x128xf32, #tpu.memory_space<vmem>>, vector<256x128xf32>
      tpu.vector_store %arg6[%c0_14, %c0_15], %16 {strides = array<i32>} : memref<256x128xf32, #tpu.memory_space<vmem>>, vector<256x128xf32>,
    } else {
    }
    return
  }
  func.func @transform_0(%arg0: i32, %arg1: i32, %arg2: i32) -> (i32, i32) {
    %c0_i32 = arith.constant 0 : i32
    return %arg0, %arg2 : i32, i32
  }
  func.func @transform_1(%arg0: i32, %arg1: i32, %arg2: i32) -> (i32, i32) {
    %c0_i32 = arith.constant 0 : i32
    return %arg2, %arg1 : i32, i32
  }
  func.func @transform_2(%arg0: i32, %arg1: i32, %arg2: i32) -> (i32, i32) {
    %c0_i32 = arith.constant 0 : i32
    %c0_i32_0 = arith.constant 0 : i32
    return %c0_i32, %arg1 : i32, i32
  }
  func.func @transform_3(%arg0: i32, %arg1: i32, %arg2: i32) -> (i32, i32) {
    %c0_i32 = arith.constant 0 : i32
    return %arg0, %arg1 : i32, i32
  }
}

</mosaic_0001>

<llo_original>
// kernel: vqvae_forward.5
$region0: #{vqvae_forward.5}
  #allocation0 [shape = 'u32[]', space=smem, size = 0x4, offset = 0x4, fixed_abs, tag = 'smem constant byte address 0x4 - core index']
  #allocation1 [shape = 'u32[144,128]{1,0:T(1,128)}', space=vmem, size = 0x12000, scoped, tag = 'internal scratch']
  #allocation2 [shape = 'f32[128,128]{1,0:T(8,128)}', space=vmem, size = 0x10000, scoped, tag = 'scratch operand']
  %s0 = inlined_call_operand.vmem [shape: bf16[128,128], index: 0, kind: input, shape index: {}]
  %s1 = inlined_call_operand.vmem [shape: bf16[128,128], index: 1, kind: input, shape index: {}]
  %s2 = inlined_call_operand.vmem [shape: f32[1,128], index: 2, kind: input, shape index: {}]
  %s3 = inlined_call_operand.vmem [shape: bf16[128,128], index: 3, kind: output, shape index: {}]
  %s4 = sld [smem:[#allocation0]]
  $region30: #{vqvae_forward.5} parent=0
    _
  %s6 = ssub.s32 1, %s4
  %s7 = scalar_select 0, %s6, %s4
  // Predicated region
  $region2: #{vqvae_forward.5} parent=0 // pred_check
    _
  $region3: #{vqvae_forward.5} parent=0 // pred_check_branch
    %9 = sbr.rel (0) target = $region5
  $region4: #{vqvae_forward.5} parent=0 // pred_region
    _
  $region5: #{vqvae_forward.5} parent=0 // pred_fallthru
    _
  // Predicated region
  $region6: #{vqvae_forward.5} parent=0 // pred_check
    _
  $region7: #{vqvae_forward.5} parent=0 // pred_check_branch
    %11 = sbr.rel (0) target = $region9
  $region8: #{vqvae_forward.5} parent=0 // pred_region
    _
  $region9: #{vqvae_forward.5} parent=0 // pred_fallthru
    _
  // Predicated region
  $region10: #{vqvae_forward.5} parent=0 // pred_check
    _
  $region11: #{vqvae_forward.5} parent=0 // pred_check_branch
    %13 = sbr.rel (0) target = $region13
  $region12: #{vqvae_forward.5} parent=0 // pred_region
    _
  $region13: #{vqvae_forward.5} parent=0 // pred_fallthru
    _
  %p15 = scmp.eq.s32.totalorder 0, 0
  // Predicated region
  $region14: #{vqvae_forward.5} parent=0 // pred_check
    %p16 = pneg %p15
  $region15: #{vqvae_forward.5} parent=0 // pred_check_branch
    %18 = sbr.rel (%p16) target = $region17
  $region16: #{vqvae_forward.5} parent=0 // pred_region
    %19 = vst [vmem:[#allocation2] sm:$0xff] 0.0
    %20 = vst [vmem:[#allocation2 + $0x8] sm:$0xff] 0.0
    %21 = vst [vmem:[#allocation2 + $0x10] sm:$0xff] 0.0
    %22 = vst [vmem:[#allocation2 + $0x18] sm:$0xff] 0.0
    %23 = vst [vmem:[#allocation2 + $0x20] sm:$0xff] 0.0
    %24 = vst [vmem:[#allocation2 + $0x28] sm:$0xff] 0.0
    %25 = vst [vmem:[#allocation2 + $0x30] sm:$0xff] 0.0
    %26 = vst [vmem:[#allocation2 + $0x38] sm:$0xff] 0.0
    %27 = vst [vmem:[#allocation2 + $0x40] sm:$0xff] 0.0
    %28 = vst [vmem:[#allocation2 + $0x48] sm:$0xff] 0.0
    %29 = vst [vmem:[#allocation2 + $0x50] sm:$0xff] 0.0
    %30 = vst [vmem:[#allocation2 + $0x58] sm:$0xff] 0.0
    %31 = vst [vmem:[#allocation2 + $0x60] sm:$0xff] 0.0
    %32 = vst [vmem:[#allocation2 + $0x68] sm:$0xff] 0.0
    %33 = vst [vmem:[#allocation2 + $0x70] sm:$0xff] 0.0
    %34 = vst [vmem:[#allocation2 + $0x78] sm:$0xff] 0.0
  $region17: #{vqvae_forward.5} parent=0 // pred_fallthru
    _
  %v35 = vld [vmem:[#allocation2] sm:$0xff]
  %v36 = vld [vmem:[#allocation2 + $0x8] sm:$0xff]
  %v37 = vld [vmem:[#allocation2 + $0x10] sm:$0xff]
  %v38 = vld [vmem:[#allocation2 + $0x18] sm:$0xff]
  %v39 = vld [vmem:[#allocation2 + $0x20] sm:$0xff]
  %v40 = vld [vmem:[#allocation2 + $0x28] sm:$0xff]
  %v41 = vld [vmem:[#allocation2 + $0x30] sm:$0xff]
  %v42 = vld [vmem:[#allocation2 + $0x38] sm:$0xff]
  %v43 = vld [vmem:[#allocation2 + $0x40] sm:$0xff]
  %v44 = vld [vmem:[#allocation2 + $0x48] sm:$0xff]
  %v45 = vld [vmem:[#allocation2 + $0x50] sm:$0xff]
  %v46 = vld [vmem:[#allocation2 + $0x58] sm:$0xff]
  %v47 = vld [vmem:[#allocation2 + $0x60] sm:$0xff]
  %v48 = vld [vmem:[#allocation2 + $0x68] sm:$0xff]
  %v49 = vld [vmem:[#allocation2 + $0x70] sm:$0xff]
  %v50 = vld [vmem:[#allocation2 + $0x78] sm:$0xff]
  %v51 = vld [vmem:[%s0] sm:$0xf]
  %v52 = vld [vmem:[%s0 + $0x4] sm:$0xf]
  %v53 = vld [vmem:[%s0 + $0x8] sm:$0xf]
  %v54 = vld [vmem:[%s0 + $0xc] sm:$0xf]
  %v55 = vld [vmem:[%s0 + $0x10] sm:$0xf]
  %v56 = vld [vmem:[%s0 + $0x14] sm:$0xf]
  %v57 = vld [vmem:[%s0 + $0x18] sm:$0xf]
  %v58 = vld [vmem:[%s0 + $0x1c] sm:$0xf]
  %v59 = vld [vmem:[%s0 + $0x20] sm:$0xf]
  %v60 = vld [vmem:[%s0 + $0x24] sm:$0xf]
  %v61 = vld [vmem:[%s0 + $0x28] sm:$0xf]
  %v62 = vld [vmem:[%s0 + $0x2c] sm:$0xf]
  %v63 = vld [vmem:[%s0 + $0x30] sm:$0xf]
  %v64 = vld [vmem:[%s0 + $0x34] sm:$0xf]
  %v65 = vld [vmem:[%s0 + $0x38] sm:$0xf]
  %v66 = vld [vmem:[%s0 + $0x3c] sm:$0xf]
  %v67 = vld [vmem:[%s1] sm:$0xf]
  %v68 = vld [vmem:[%s1 + $0x4] sm:$0xf]
  %v69 = vld [vmem:[%s1 + $0x8] sm:$0xf]
  %v70 = vld [vmem:[%s1 + $0xc] sm:$0xf]
  %v71 = vld [vmem:[%s1 + $0x10] sm:$0xf]
  %v72 = vld [vmem:[%s1 + $0x14] sm:$0xf]
  %v73 = vld [vmem:[%s1 + $0x18] sm:$0xf]
  %v74 = vld [vmem:[%s1 + $0x1c] sm:$0xf]
  %v75 = vld [vmem:[%s1 + $0x20] sm:$0xf]
  %v76 = vld [vmem:[%s1 + $0x24] sm:$0xf]
  %v77 = vld [vmem:[%s1 + $0x28] sm:$0xf]
  %v78 = vld [vmem:[%s1 + $0x2c] sm:$0xf]
  %v79 = vld [vmem:[%s1 + $0x30] sm:$0xf]
  %v80 = vld [vmem:[%s1 + $0x34] sm:$0xf]
  %v81 = vld [vmem:[%s1 + $0x38] sm:$0xf]
  %v82 = vld [vmem:[%s1 + $0x3c] sm:$0xf]
  %v99 = vunpack.c.l.b16 %v51
  %v100 = vunpack.c.l.b16 %v52
  %v101 = vunpack.c.l.b16 %v53
  %v102 = vunpack.c.l.b16 %v54
  %v103 = vunpack.c.l.b16 %v55
  %v104 = vunpack.c.l.b16 %v56
  %v105 = vunpack.c.l.b16 %v57
  %v106 = vunpack.c.l.b16 %v58
  %v107 = vunpack.c.l.b16 %v59
  %v108 = vunpack.c.l.b16 %v60
  %v109 = vunpack.c.l.b16 %v61
  %v110 = vunpack.c.l.b16 %v62
  %v111 = vunpack.c.l.b16 %v63
  %v112 = vunpack.c.l.b16 %v64
  %v113 = vunpack.c.l.b16 %v65
  %v114 = vunpack.c.l.b16 %v66
  %v115 = vpack.c.b16 %v100, %v99
  %v116 = vpack.c.b16 %v102, %v101
  %v117 = vpack.c.b16 %v104, %v103
  %v118 = vpack.c.b16 %v106, %v105
  %v119 = vpack.c.b16 %v108, %v107
  %v120 = vpack.c.b16 %v110, %v109
  %v121 = vpack.c.b16 %v112, %v111
  %v122 = vpack.c.b16 %v114, %v113
  %v147 = vunpack.c.l.b16 %v67
  %v148 = vunpack.c.l.b16 %v68
  %v149 = vunpack.c.l.b16 %v69
  %v150 = vunpack.c.l.b16 %v70
  %v151 = vunpack.c.l.b16 %v71
  %v152 = vunpack.c.l.b16 %v72
  %v153 = vunpack.c.l.b16 %v73
  %v154 = vunpack.c.l.b16 %v74
  %v155 = vunpack.c.l.b16 %v75
  %v156 = vunpack.c.l.b16 %v76
  %v157 = vunpack.c.l.b16 %v77
  %v158 = vunpack.c.l.b16 %v78
  %v159 = vunpack.c.l.b16 %v79
  %v160 = vunpack.c.l.b16 %v80
  %v161 = vunpack.c.l.b16 %v81
  %v162 = vunpack.c.l.b16 %v82
  %v163 = vpack.c.b16 %v148, %v147
  %v164 = vpack.c.b16 %v150, %v149
  %v165 = vpack.c.b16 %v152, %v151
  %v166 = vpack.c.b16 %v154, %v153
  %v167 = vpack.c.b16 %v156, %v155
  %v168 = vpack.c.b16 %v158, %v157
  %v169 = vpack.c.b16 %v160, %v159
  %v170 = vpack.c.b16 %v162, %v161
  %179 = vmatprep.subr.bf16.mxu0 0
  %180 = vmatpush1.bf16.msra.mxu0 %v163
  %181 = vmatprep.subr.bf16.mxu0 0
  %182 = vmatpush1.bf16.msra.mxu0 %v164
  %183 = vmatprep.subr.bf16.mxu0 0
  %184 = vmatpush1.bf16.msra.mxu0 %v165
  %185 = vmatprep.subr.bf16.mxu0 0
  %186 = vmatpush1.bf16.msra.mxu0 %v166
  %187 = vmatprep.subr.bf16.mxu0 0
  %188 = vmatpush1.bf16.msra.mxu0 %v167
  %189 = vmatprep.subr.bf16.mxu0 0
  %190 = vmatpush1.bf16.msra.mxu0 %v168
  %191 = vmatprep.subr.bf16.mxu0 0
  %192 = vmatpush1.bf16.msra.mxu0 %v169
  %193 = vmatprep.subr.bf16.mxu0 0
  %194 = vmatpush1.bf16.msra.mxu0 %v170
  %195 = vmatprep.subr.bf16.mxu0 0
  %196 = vmatpush1.bf16.msra.mxu0 0
  %197 = vmatprep.subr.bf16.mxu0 0
  %198 = vmatpush1.bf16.msra.mxu0 0
  %199 = vmatprep.subr.bf16.mxu0 0
  %200 = vmatpush1.bf16.msra.mxu0 0
  %201 = vmatprep.subr.bf16.mxu0 0
  %202 = vmatpush1.bf16.msra.mxu0 0
  %203 = vmatprep.subr.bf16.mxu0 0
  %204 = vmatpush1.bf16.msra.mxu0 0
  %205 = vmatprep.subr.bf16.mxu0 0
  %206 = vmatpush1.bf16.msra.mxu0 0
  %207 = vmatprep.subr.bf16.mxu0 0
  %208 = vmatpush1.bf16.msra.mxu0 0
  %209 = vmatprep.subr.bf16.mxu0 0
  %210 = vmatpush1.bf16.msra.mxu0 0
  %211 = vmatprep.mubr.bf16.mxu0 0
  %212 = vmatmul.mubr.bf16.gmra.mrb[0].mxu0 %v115
  %v213 = vpop.f32.mrb[0].mxu0
  %v214 = vadd.f32 0.0, %v213
  %v215 = vpop.f32.mrb[0].mxu0
  %v216 = vpop.f32.mrb[0].mxu0
  %v217 = vadd.f32 0.0, %v216
  %v218 = vpop.f32.mrb[0].mxu0
  %219 = vmatprep.mubr.bf16.mxu0 0
  %220 = vmatmul.mubr.bf16.gmra.mrb[0].mxu0 %v116
  %v221 = vpop.f32.mrb[0].mxu0
  %v222 = vadd.f32 0.0, %v221
  %v223 = vpop.f32.mrb[0].mxu0
  %v224 = vpop.f32.mrb[0].mxu0
  %v225 = vadd.f32 0.0, %v224
  %v226 = vpop.f32.mrb[0].mxu0
  %227 = vmatprep.mubr.bf16.mxu0 0
  %228 = vmatmul.mubr.bf16.gmra.mrb[0].mxu0 %v117
  %v229 = vpop.f32.mrb[0].mxu0
  %v230 = vadd.f32 0.0, %v229
  %v231 = vpop.f32.mrb[0].mxu0
  %v232 = vpop.f32.mrb[0].mxu0
  %v233 = vadd.f32 0.0, %v232
  %v234 = vpop.f32.mrb[0].mxu0
  %235 = vmatprep.mubr.bf16.mxu0 0
  %236 = vmatmul.mubr.bf16.gmra.mrb[0].mxu0 %v118
  %v237 = vpop.f32.mrb[0].mxu0
  %v238 = vadd.f32 0.0, %v237
  %v239 = vpop.f32.mrb[0].mxu0
  %v240 = vpop.f32.mrb[0].mxu0
  %v241 = vadd.f32 0.0, %v240
  %v242 = vpop.f32.mrb[0].mxu0
  %243 = vmatprep.mubr.bf16.mxu0 0
  %244 = vmatmul.mubr.bf16.gmra.mrb[0].mxu0 %v119
  %v245 = vpop.f32.mrb[0].mxu0
  %v246 = vadd.f32 0.0, %v245
  %v247 = vpop.f32.mrb[0].mxu0
  %v248 = vpop.f32.mrb[0].mxu0
  %v249 = vadd.f32 0.0, %v248
  %v250 = vpop.f32.mrb[0].mxu0
  %251 = vmatprep.mubr.bf16.mxu0 0
  %252 = vmatmul.mubr.bf16.gmra.mrb[0].mxu0 %v120
  %v253 = vpop.f32.mrb[0].mxu0
  %v254 = vadd.f32 0.0, %v253
  %v255 = vpop.f32.mrb[0].mxu0
  %v256 = vpop.f32.mrb[0].mxu0
  %v257 = vadd.f32 0.0, %v256
  %v258 = vpop.f32.mrb[0].mxu0
  %259 = vmatprep.mubr.bf16.mxu0 0
  %260 = vmatmul.mubr.bf16.gmra.mrb[0].mxu0 %v121
  %v261 = vpop.f32.mrb[0].mxu0
  %v262 = vadd.f32 0.0, %v261
  %v263 = vpop.f32.mrb[0].mxu0
  %v264 = vpop.f32.mrb[0].mxu0
  %v265 = vadd.f32 0.0, %v264
  %v266 = vpop.f32.mrb[0].mxu0
  %267 = vmatprep.mubr.bf16.mxu0 0
  %268 = vmatmul.mubr.bf16.gmra.mrb[0].mxu0 %v122
  %v269 = vpop.f32.mrb[0].mxu0
  %v270 = vadd.f32 0.0, %v269
  %v271 = vpop.f32.mrb[0].mxu0
  %v272 = vpop.f32.mrb[0].mxu0
  %v273 = vadd.f32 0.0, %v272
  %v274 = vpop.f32.mrb[0].mxu0
  %275 = vdwg.mxu0
  %v276 = vadd.f32 %v35, %v214
  %v277 = vadd.f32 %v36, %v217
  %v278 = vadd.f32 %v37, %v222
  %v279 = vadd.f32 %v38, %v225
  %v280 = vadd.f32 %v39, %v230
  %v281 = vadd.f32 %v40, %v233
  %v282 = vadd.f32 %v41, %v238
  %v283 = vadd.f32 %v42, %v241
  %v284 = vadd.f32 %v43, %v246
  %v285 = vadd.f32 %v44, %v249
  %v286 = vadd.f32 %v45, %v254
  %v287 = vadd.f32 %v46, %v257
  %v288 = vadd.f32 %v47, %v262
  %v289 = vadd.f32 %v48, %v265
  %v290 = vadd.f32 %v49, %v270
  %v291 = vadd.f32 %v50, %v273
  %292 = vst [vmem:[#allocation2] sm:$0xff] %v276
  %293 = vst [vmem:[#allocation2 + $0x8] sm:$0xff] %v277
  %294 = vst [vmem:[#allocation2 + $0x10] sm:$0xff] %v278
  %295 = vst [vmem:[#allocation2 + $0x18] sm:$0xff] %v279
  %296 = vst [vmem:[#allocation2 + $0x20] sm:$0xff] %v280
  %297 = vst [vmem:[#allocation2 + $0x28] sm:$0xff] %v281
  %298 = vst [vmem:[#allocation2 + $0x30] sm:$0xff] %v282
  %299 = vst [vmem:[#allocation2 + $0x38] sm:$0xff] %v283
  %300 = vst [vmem:[#allocation2 + $0x40] sm:$0xff] %v284
  %301 = vst [vmem:[#allocation2 + $0x48] sm:$0xff] %v285
  %302 = vst [vmem:[#allocation2 + $0x50] sm:$0xff] %v286
  %303 = vst [vmem:[#allocation2 + $0x58] sm:$0xff] %v287
  %304 = vst [vmem:[#allocation2 + $0x60] sm:$0xff] %v288
  %305 = vst [vmem:[#allocation2 + $0x68] sm:$0xff] %v289
  %306 = vst [vmem:[#allocation2 + $0x70] sm:$0xff] %v290
  %307 = vst [vmem:[#allocation2 + $0x78] sm:$0xff] %v291
  // Predicated region
  $region18: #{vqvae_forward.5} parent=0 // pred_check
    %p308 = pneg %p15
  $region19: #{vqvae_forward.5} parent=0 // pred_check_branch
    %310 = sbr.rel (%p308) target = $region21
  $region20: #{vqvae_forward.5} parent=0 // pred_region
    %v311 = vld [vmem:[#allocation2] sm:$0xff]
    %v312 = vld [vmem:[#allocation2 + $0x8] sm:$0xff]
    %v313 = vld [vmem:[#allocation2 + $0x10] sm:$0xff]
    %v314 = vld [vmem:[#allocation2 + $0x18] sm:$0xff]
    %v315 = vld [vmem:[#allocation2 + $0x20] sm:$0xff]
    %v316 = vld [vmem:[#allocation2 + $0x28] sm:$0xff]
    %v317 = vld [vmem:[#allocation2 + $0x30] sm:$0xff]
    %v318 = vld [vmem:[#allocation2 + $0x38] sm:$0xff]
    %v319 = vld [vmem:[#allocation2 + $0x40] sm:$0xff]
    %v320 = vld [vmem:[#allocation2 + $0x48] sm:$0xff]
    %v321 = vld [vmem:[#allocation2 + $0x50] sm:$0xff]
    %v322 = vld [vmem:[#allocation2 + $0x58] sm:$0xff]
    %v323 = vld [vmem:[#allocation2 + $0x60] sm:$0xff]
    %v324 = vld [vmem:[#allocation2 + $0x68] sm:$0xff]
    %v325 = vld [vmem:[#allocation2 + $0x70] sm:$0xff]
    %v326 = vld [vmem:[#allocation2 + $0x78] sm:$0xff]
    %v327 = vld [vmem:[%s2] sm:$0x1]
    %v329 = vlaneseq
    %v330 = vshrl.u32 %v329, 7
    %v331 = vsub.s32 0, %v330
    %v332 = vrot.slane %v327, %v331
    %v334 = vadd.f32 %v311, %v332
    %v335 = vadd.f32 %v312, %v332
    %v336 = vadd.f32 %v313, %v332
    %v337 = vadd.f32 %v314, %v332
    %v338 = vadd.f32 %v315, %v332
    %v339 = vadd.f32 %v316, %v332
    %v340 = vadd.f32 %v317, %v332
    %v341 = vadd.f32 %v318, %v332
    %v342 = vadd.f32 %v319, %v332
    %v343 = vadd.f32 %v320, %v332
    %v344 = vadd.f32 %v321, %v332
    %v345 = vadd.f32 %v322, %v332
    %v346 = vadd.f32 %v323, %v332
    %v347 = vadd.f32 %v324, %v332
    %v348 = vadd.f32 %v325, %v332
    %v349 = vadd.f32 %v326, %v332
    %v350 = vmax.f32 %v334, 0.0
    %v351 = vmax.f32 %v335, 0.0
    %v352 = vmax.f32 %v336, 0.0
    %v353 = vmax.f32 %v337, 0.0
    %v354 = vmax.f32 %v338, 0.0
    %v355 = vmax.f32 %v339, 0.0
    %v356 = vmax.f32 %v340, 0.0
    %v357 = vmax.f32 %v341, 0.0
    %v358 = vmax.f32 %v342, 0.0
    %v359 = vmax.f32 %v343, 0.0
    %v360 = vmax.f32 %v344, 0.0
    %v361 = vmax.f32 %v345, 0.0
    %v362 = vmax.f32 %v346, 0.0
    %v363 = vmax.f32 %v347, 0.0
    %v364 = vmax.f32 %v348, 0.0
    %v365 = vmax.f32 %v349, 0.0
    %v366 = vpack.c.bf16 %v351, %v350
    %v367 = vpack.c.bf16 %v353, %v352
    %v368 = vpack.c.bf16 %v355, %v354
    %v369 = vpack.c.bf16 %v357, %v356
    %v370 = vpack.c.bf16 %v359, %v358
    %v371 = vpack.c.bf16 %v361, %v360
    %v372 = vpack.c.bf16 %v363, %v362
    %v373 = vpack.c.bf16 %v365, %v364
    %v382 = vunpack.c.l.b16 %v366
    %v383 = vunpack.c.h.b16 %v366
    %v384 = vunpack.c.l.b16 %v367
    %v385 = vunpack.c.h.b16 %v367
    %v386 = vunpack.c.l.b16 %v368
    %v387 = vunpack.c.h.b16 %v368
    %v388 = vunpack.c.l.b16 %v369
    %v389 = vunpack.c.h.b16 %v369
    %v390 = vunpack.c.l.b16 %v370
    %v391 = vunpack.c.h.b16 %v370
    %v392 = vunpack.c.l.b16 %v371
    %v393 = vunpack.c.h.b16 %v371
    %v394 = vunpack.c.l.b16 %v372
    %v395 = vunpack.c.h.b16 %v372
    %v396 = vunpack.c.l.b16 %v373
    %v397 = vunpack.c.h.b16 %v373
    %v398 = vpack.c.b16 %v382, %v382
    %v399 = vpack.c.b16 %v383, %v383
    %v400 = vpack.c.b16 %v384, %v384
    %v401 = vpack.c.b16 %v385, %v385
    %v402 = vpack.c.b16 %v386, %v386
    %v403 = vpack.c.b16 %v387, %v387
    %v404 = vpack.c.b16 %v388, %v388
    %v405 = vpack.c.b16 %v389, %v389
    %v406 = vpack.c.b16 %v390, %v390
    %v407 = vpack.c.b16 %v391, %v391
    %v408 = vpack.c.b16 %v392, %v392
    %v409 = vpack.c.b16 %v393, %v393
    %v410 = vpack.c.b16 %v394, %v394
    %v411 = vpack.c.b16 %v395, %v395
    %v412 = vpack.c.b16 %v396, %v396
    %v413 = vpack.c.b16 %v397, %v397
    %430 = vst [vmem:[%s3] sm:$0xf] %v398
    %431 = vst [vmem:[%s3 + $0x4] sm:$0xf] %v399
    %432 = vst [vmem:[%s3 + $0x8] sm:$0xf] %v400
    %433 = vst [vmem:[%s3 + $0xc] sm:$0xf] %v401
    %434 = vst [vmem:[%s3 + $0x10] sm:$0xf] %v402
    %435 = vst [vmem:[%s3 + $0x14] sm:$0xf] %v403
    %436 = vst [vmem:[%s3 + $0x18] sm:$0xf] %v404
    %437 = vst [vmem:[%s3 + $0x1c] sm:$0xf] %v405
    %438 = vst [vmem:[%s3 + $0x20] sm:$0xf] %v406
    %439 = vst [vmem:[%s3 + $0x24] sm:$0xf] %v407
    %440 = vst [vmem:[%s3 + $0x28] sm:$0xf] %v408
    %441 = vst [vmem:[%s3 + $0x2c] sm:$0xf] %v409
    %442 = vst [vmem:[%s3 + $0x30] sm:$0xf] %v410
    %443 = vst [vmem:[%s3 + $0x34] sm:$0xf] %v411
    %444 = vst [vmem:[%s3 + $0x38] sm:$0xf] %v412
    %445 = vst [vmem:[%s3 + $0x3c] sm:$0xf] %v413
  $region21: #{vqvae_forward.5} parent=0 // pred_fallthru
    _
  // Predicated region
  $region22: #{vqvae_forward.5} parent=0 // pred_check
    _
  $region23: #{vqvae_forward.5} parent=0 // pred_check_branch
    %447 = sbr.rel (0) target = $region25
  $region24: #{vqvae_forward.5} parent=0 // pred_region
    _
  $region25: #{vqvae_forward.5} parent=0 // pred_fallthru
    _
  // Predicated region
  $region26: #{vqvae_forward.5} parent=0 // pred_check
    _
  $region27: #{vqvae_forward.5} parent=0 // pred_check_branch
    %449 = sbr.rel (0) target = $region29
  $region28: #{vqvae_forward.5} parent=0 // pred_region
    _
  $region29: #{vqvae_forward.5} parent=0 // pred_fallthru
    _

// kernel: vqvae_forward.6
$region0: #{vqvae_forward.6}
  #allocation0 [shape = 'u32[]', space=smem, size = 0x4, offset = 0x4, fixed_abs, tag = 'smem constant byte address 0x4 - core index']
  #allocation1 [shape = 'u32[144,128]{1,0:T(1,128)}', space=vmem, size = 0x12000, scoped, tag = 'internal scratch']
  #allocation2 [shape = 'f32[32,128]{1,0:T(8,128)}', space=vmem, size = 0x4000, scoped, tag = 'scratch operand']
  %s0 = inlined_call_operand.vmem [shape: bf16[32,128], index: 0, kind: input, shape index: {}]
  %s1 = inlined_call_operand.vmem [shape: bf16[128,128], index: 1, kind: input, shape index: {}]
  %s2 = inlined_call_operand.vmem [shape: f32[1,128], index: 2, kind: input, shape index: {}]
  %s3 = inlined_call_operand.vmem [shape: f32[32,128], index: 3, kind: output, shape index: {}]
  %s4 = sld [smem:[#allocation0]]
  $region30: #{vqvae_forward.6} parent=0
    _
  %s6 = ssub.s32 1, %s4
  %s7 = scalar_select 0, %s6, %s4
  // Predicated region
  $region2: #{vqvae_forward.6} parent=0 // pred_check
    _
  $region3: #{vqvae_forward.6} parent=0 // pred_check_branch
    %9 = sbr.rel (0) target = $region5
  $region4: #{vqvae_forward.6} parent=0 // pred_region
    _
  $region5: #{vqvae_forward.6} parent=0 // pred_fallthru
    _
  // Predicated region
  $region6: #{vqvae_forward.6} parent=0 // pred_check
    _
  $region7: #{vqvae_forward.6} parent=0 // pred_check_branch
    %11 = sbr.rel (0) target = $region9
  $region8: #{vqvae_forward.6} parent=0 // pred_region
    _
  $region9: #{vqvae_forward.6} parent=0 // pred_fallthru
    _
  // Predicated region
  $region10: #{vqvae_forward.6} parent=0 // pred_check
    _
  $region11: #{vqvae_forward.6} parent=0 // pred_check_branch
    %13 = sbr.rel (0) target = $region13
  $region12: #{vqvae_forward.6} parent=0 // pred_region
    _
  $region13: #{vqvae_forward.6} parent=0 // pred_fallthru
    _
  %p15 = scmp.eq.s32.totalorder 0, 0
  // Predicated region
  $region14: #{vqvae_forward.6} parent=0 // pred_check
    %p16 = pneg %p15
  $region15: #{vqvae_forward.6} parent=0 // pred_check_branch
    %18 = sbr.rel (%p16) target = $region17
  $region16: #{vqvae_forward.6} parent=0 // pred_region
    %19 = vst [vmem:[#allocation2] sm:$0xff] 0.0
    %20 = vst [vmem:[#allocation2 + $0x8] sm:$0xff] 0.0
    %21 = vst [vmem:[#allocation2 + $0x10] sm:$0xff] 0.0
    %22 = vst [vmem:[#allocation2 + $0x18] sm:$0xff] 0.0
  $region17: #{vqvae_forward.6} parent=0 // pred_fallthru
    _
  %v23 = vld [vmem:[#allocation2] sm:$0xff]
  %v24 = vld [vmem:[#allocation2 + $0x8] sm:$0xff]
  %v25 = vld [vmem:[#allocation2 + $0x10] sm:$0xff]
  %v26 = vld [vmem:[#allocation2 + $0x18] sm:$0xff]
  %v27 = vld [vmem:[%s0] sm:$0xf]
  %v28 = vld [vmem:[%s0 + $0x4] sm:$0xf]
  %v29 = vld [vmem:[%s0 + $0x8] sm:$0xf]
  %v30 = vld [vmem:[%s0 + $0xc] sm:$0xf]
  %v31 = vld [vmem:[%s1] sm:$0xf]
  %v32 = vld [vmem:[%s1 + $0x4] sm:$0xf]
  %v33 = vld [vmem:[%s1 + $0x8] sm:$0xf]
  %v34 = vld [vmem:[%s1 + $0xc] sm:$0xf]
  %v35 = vld [vmem:[%s1 + $0x10] sm:$0xf]
  %v36 = vld [vmem:[%s1 + $0x14] sm:$0xf]
  %v37 = vld [vmem:[%s1 + $0x18] sm:$0xf]
  %v38 = vld [vmem:[%s1 + $0x1c] sm:$0xf]
  %v39 = vld [vmem:[%s1 + $0x20] sm:$0xf]
  %v40 = vld [vmem:[%s1 + $0x24] sm:$0xf]
  %v41 = vld [vmem:[%s1 + $0x28] sm:$0xf]
  %v42 = vld [vmem:[%s1 + $0x2c] sm:$0xf]
  %v43 = vld [vmem:[%s1 + $0x30] sm:$0xf]
  %v44 = vld [vmem:[%s1 + $0x34] sm:$0xf]
  %v45 = vld [vmem:[%s1 + $0x38] sm:$0xf]
  %v46 = vld [vmem:[%s1 + $0x3c] sm:$0xf]
  %v51 = vunpack.c.l.b16 %v27
  %v52 = vunpack.c.l.b16 %v28
  %v53 = vunpack.c.l.b16 %v29
  %v54 = vunpack.c.l.b16 %v30
  %v55 = vpack.c.b16 %v52, %v51
  %v56 = vpack.c.b16 %v54, %v53
  %v75 = vunpack.c.l.b16 %v31
  %v76 = vunpack.c.l.b16 %v32
  %v77 = vunpack.c.l.b16 %v33
  %v78 = vunpack.c.l.b16 %v34
  %v79 = vunpack.c.l.b16 %v35
  %v80 = vunpack.c.l.b16 %v36
  %v81 = vunpack.c.l.b16 %v37
  %v82 = vunpack.c.l.b16 %v38
  %v83 = vunpack.c.l.b16 %v39
  %v84 = vunpack.c.l.b16 %v40
  %v85 = vunpack.c.l.b16 %v41
  %v86 = vunpack.c.l.b16 %v42
  %v87 = vunpack.c.l.b16 %v43
  %v88 = vunpack.c.l.b16 %v44
  %v89 = vunpack.c.l.b16 %v45
  %v90 = vunpack.c.l.b16 %v46
  %v91 = vpack.c.b16 %v76, %v75
  %v92 = vpack.c.b16 %v78, %v77
  %v93 = vpack.c.b16 %v80, %v79
  %v94 = vpack.c.b16 %v82, %v81
  %v95 = vpack.c.b16 %v84, %v83
  %v96 = vpack.c.b16 %v86, %v85
  %v97 = vpack.c.b16 %v88, %v87
  %v98 = vpack.c.b16 %v90, %v89
  %107 = vmatprep.subr.bf16.mxu0 0
  %108 = vmatpush1.bf16.msra.mxu0 %v91
  %109 = vmatprep.subr.bf16.mxu0 0
  %110 = vmatpush1.bf16.msra.mxu0 %v92
  %111 = vmatprep.subr.bf16.mxu0 0
  %112 = vmatpush1.bf16.msra.mxu0 %v93
  %113 = vmatprep.subr.bf16.mxu0 0
  %114 = vmatpush1.bf16.msra.mxu0 %v94
  %115 = vmatprep.subr.bf16.mxu0 0
  %116 = vmatpush1.bf16.msra.mxu0 %v95
  %117 = vmatprep.subr.bf16.mxu0 0
  %118 = vmatpush1.bf16.msra.mxu0 %v96
  %119 = vmatprep.subr.bf16.mxu0 0
  %120 = vmatpush1.bf16.msra.mxu0 %v97
  %121 = vmatprep.subr.bf16.mxu0 0
  %122 = vmatpush1.bf16.msra.mxu0 %v98
  %123 = vmatprep.subr.bf16.mxu0 0
  %124 = vmatpush1.bf16.msra.mxu0 0
  %125 = vmatprep.subr.bf16.mxu0 0
  %126 = vmatpush1.bf16.msra.mxu0 0
  %127 = vmatprep.subr.bf16.mxu0 0
  %128 = vmatpush1.bf16.msra.mxu0 0
  %129 = vmatprep.subr.bf16.mxu0 0
  %130 = vmatpush1.bf16.msra.mxu0 0
  %131 = vmatprep.subr.bf16.mxu0 0
  %132 = vmatpush1.bf16.msra.mxu0 0
  %133 = vmatprep.subr.bf16.mxu0 0
  %134 = vmatpush1.bf16.msra.mxu0 0
  %135 = vmatprep.subr.bf16.mxu0 0
  %136 = vmatpush1.bf16.msra.mxu0 0
  %137 = vmatprep.subr.bf16.mxu0 0
  %138 = vmatpush1.bf16.msra.mxu0 0
  %139 = vmatprep.mubr.bf16.mxu0 0
  %140 = vmatmul.mubr.bf16.gmra.mrb[0].mxu0 %v55
  %v141 = vpop.f32.mrb[0].mxu0
  %v142 = vadd.f32 0.0, %v141
  %v143 = vpop.f32.mrb[0].mxu0
  %v144 = vpop.f32.mrb[0].mxu0
  %v145 = vadd.f32 0.0, %v144
  %v146 = vpop.f32.mrb[0].mxu0
  %147 = vmatprep.mubr.bf16.mxu0 0
  %148 = vmatmul.mubr.bf16.gmra.mrb[0].mxu0 %v56
  %v149 = vpop.f32.mrb[0].mxu0
  %v150 = vadd.f32 0.0, %v149
  %v151 = vpop.f32.mrb[0].mxu0
  %v152 = vpop.f32.mrb[0].mxu0
  %v153 = vadd.f32 0.0, %v152
  %v154 = vpop.f32.mrb[0].mxu0
  %155 = vdwg.mxu0
  %v156 = vadd.f32 %v23, %v142
  %v157 = vadd.f32 %v24, %v145
  %v158 = vadd.f32 %v25, %v150
  %v159 = vadd.f32 %v26, %v153
  %160 = vst [vmem:[#allocation2] sm:$0xff] %v156
  %161 = vst [vmem:[#allocation2 + $0x8] sm:$0xff] %v157
  %162 = vst [vmem:[#allocation2 + $0x10] sm:$0xff] %v158
  %163 = vst [vmem:[#allocation2 + $0x18] sm:$0xff] %v159
  // Predicated region
  $region18: #{vqvae_forward.6} parent=0 // pred_check
    %p164 = pneg %p15
  $region19: #{vqvae_forward.6} parent=0 // pred_check_branch
    %166 = sbr.rel (%p164) target = $region21
  $region20: #{vqvae_forward.6} parent=0 // pred_region
    %v167 = vld [vmem:[#allocation2] sm:$0xff]
    %v168 = vld [vmem:[#allocation2 + $0x8] sm:$0xff]
    %v169 = vld [vmem:[#allocation2 + $0x10] sm:$0xff]
    %v170 = vld [vmem:[#allocation2 + $0x18] sm:$0xff]
    %v171 = vld [vmem:[%s2] sm:$0x1]
    %v173 = vlaneseq
    %v174 = vshrl.u32 %v173, 7
    %v175 = vsub.s32 0, %v174
    %v176 = vrot.slane %v171, %v175
    %v178 = vadd.f32 %v167, %v176
    %v179 = vadd.f32 %v168, %v176
    %v180 = vadd.f32 %v169, %v176
    %v181 = vadd.f32 %v170, %v176
    %v182 = vmax.f32 %v178, 0.0
    %v183 = vmax.f32 %v179, 0.0
    %v184 = vmax.f32 %v180, 0.0
    %v185 = vmax.f32 %v181, 0.0
    %186 = vst [vmem:[%s3] sm:$0xff] %v182
    %187 = vst [vmem:[%s3 + $0x8] sm:$0xff] %v183
    %188 = vst [vmem:[%s3 + $0x10] sm:$0xff] %v184
    %189 = vst [vmem:[%s3 + $0x18] sm:$0xff] %v185
  $region21: #{vqvae_forward.6} parent=0 // pred_fallthru
    _
  // Predicated region
  $region22: #{vqvae_forward.6} parent=0 // pred_check
    _
  $region23: #{vqvae_forward.6} parent=0 // pred_check_branch
    %191 = sbr.rel (0) target = $region25
  $region24: #{vqvae_forward.6} parent=0 // pred_region
    _
  $region25: #{vqvae_forward.6} parent=0 // pred_fallthru
    _
  // Predicated region
  $region26: #{vqvae_forward.6} parent=0 // pred_check
    _
  $region27: #{vqvae_forward.6} parent=0 // pred_check_branch
    %193 = sbr.rel (0) target = $region29
  $region28: #{vqvae_forward.6} parent=0 // pred_region
    _
  $region29: #{vqvae_forward.6} parent=0 // pred_fallthru
    _

// kernel: vqvae_forward.7
$region0: #{vqvae_forward.7}
  #allocation0 [shape = 'u32[]', space=smem, size = 0x4, offset = 0x4, fixed_abs, tag = 'smem constant byte address 0x4 - core index']
  #allocation1 [shape = 'u32[144,128]{1,0:T(1,128)}', space=vmem, size = 0x12000, scoped, tag = 'internal scratch']
  %s0 = inlined_call_operand.vmem [shape: f32[32,128], index: 0, kind: input, shape index: {}]
  %s1 = inlined_call_operand.vmem [shape: f32[128,128], index: 1, kind: input, shape index: {}]
  %s2 = inlined_call_operand.vmem [shape: f32[1,128], index: 2, kind: input, shape index: {}]
  %s3 = inlined_call_operand.vmem [shape: f32[32,128], index: 3, kind: output, shape index: {0}]
  %s4 = inlined_call_operand.vmem [shape: f32[1,128], index: 4, kind: output, shape index: {1}]
  %s5 = inlined_call_operand.vmem [shape: f32[1,128], index: 5, kind: output, shape index: {2}]
  %6 = xla_tuple %s3, %s4, %s5
  %s7 = sld [smem:[#allocation0]]
  $region42: #{vqvae_forward.7} parent=0
    _
  %s9 = ssub.s32 1, %s7
  %s10 = scalar_select 0, %s9, %s7
  // Predicated region
  $region2: #{vqvae_forward.7} parent=0 // pred_check
    _
  $region3: #{vqvae_forward.7} parent=0 // pred_check_branch
    %12 = sbr.rel (0) target = $region5
  $region4: #{vqvae_forward.7} parent=0 // pred_region
    _
  $region5: #{vqvae_forward.7} parent=0 // pred_fallthru
    _
  // Predicated region
  $region6: #{vqvae_forward.7} parent=0 // pred_check
    _
  $region7: #{vqvae_forward.7} parent=0 // pred_check_branch
    %14 = sbr.rel (0) target = $region9
  $region8: #{vqvae_forward.7} parent=0 // pred_region
    _
  $region9: #{vqvae_forward.7} parent=0 // pred_fallthru
    _
  // Predicated region
  $region10: #{vqvae_forward.7} parent=0 // pred_check
    _
  $region11: #{vqvae_forward.7} parent=0 // pred_check_branch
    %16 = sbr.rel (0) target = $region13
  $region12: #{vqvae_forward.7} parent=0 // pred_region
    _
  $region13: #{vqvae_forward.7} parent=0 // pred_fallthru
    _
  %p18 = scmp.eq.s32.totalorder 0, 0
  // Predicated region
  $region14: #{vqvae_forward.7} parent=0 // pred_check
    %p19 = pneg %p18
  $region15: #{vqvae_forward.7} parent=0 // pred_check_branch
    %21 = sbr.rel (%p19) target = $region17
  $region16: #{vqvae_forward.7} parent=0 // pred_region
    %22 = vst [vmem:[%s4] sm:$0x1] 0.0
    %23 = vst [vmem:[%s5] sm:$0x1] 0.0
  $region17: #{vqvae_forward.7} parent=0 // pred_fallthru
    _
  %v24 = vld [vmem:[%s0] sm:$0xff]
  %v25 = vld [vmem:[%s0 + $0x8] sm:$0xff]
  %v26 = vld [vmem:[%s0 + $0x10] sm:$0xff]
  %v27 = vld [vmem:[%s0 + $0x18] sm:$0xff]
  %v28 = vld [vmem:[%s1] sm:$0xff]
  %v29 = vld [vmem:[%s1 + $0x8] sm:$0xff]
  %v30 = vld [vmem:[%s1 + $0x10] sm:$0xff]
  %v31 = vld [vmem:[%s1 + $0x18] sm:$0xff]
  %v32 = vld [vmem:[%s1 + $0x20] sm:$0xff]
  %v33 = vld [vmem:[%s1 + $0x28] sm:$0xff]
  %v34 = vld [vmem:[%s1 + $0x30] sm:$0xff]
  %v35 = vld [vmem:[%s1 + $0x38] sm:$0xff]
  %v36 = vld [vmem:[%s1 + $0x40] sm:$0xff]
  %v37 = vld [vmem:[%s1 + $0x48] sm:$0xff]
  %v38 = vld [vmem:[%s1 + $0x50] sm:$0xff]
  %v39 = vld [vmem:[%s1 + $0x58] sm:$0xff]
  %v40 = vld [vmem:[%s1 + $0x60] sm:$0xff]
  %v41 = vld [vmem:[%s1 + $0x68] sm:$0xff]
  %v42 = vld [vmem:[%s1 + $0x70] sm:$0xff]
  %v43 = vld [vmem:[%s1 + $0x78] sm:$0xff]
  %v44 = vld [vmem:[%s2] sm:$0x1]
  %v45 = vmul.f32 %v24, %v24
  %v46 = vmul.f32 %v25, %v25
  %v47 = vmul.f32 %v26, %v26
  %v48 = vmul.f32 %v27, %v27
  %49 = vadd.xlane.f32.xlu0 %v45
  %v50 = vpop.xlane.xlu0 %49
  %51 = vadd.xlane.f32.xlu0 %v46
  %v52 = vpop.xlane.xlu0 %51
  %53 = vadd.xlane.f32.xlu0 %v47
  %v54 = vpop.xlane.xlu0 %53
  %55 = vadd.xlane.f32.xlu0 %v48
  %v56 = vpop.xlane.xlu0 %55
  %v57 = vpack.c.bf16 %v25, %v24
  %v58 = vpack.c.bf16 %v27, %v26
  %v59 = vpack.c.bf16 %v29, %v28
  %v60 = vpack.c.bf16 %v31, %v30
  %v61 = vpack.c.bf16 %v33, %v32
  %v62 = vpack.c.bf16 %v35, %v34
  %v63 = vpack.c.bf16 %v37, %v36
  %v64 = vpack.c.bf16 %v39, %v38
  %v65 = vpack.c.bf16 %v41, %v40
  %v66 = vpack.c.bf16 %v43, %v42
  %67 = vmatprep.subr.bf16.mxu0 0
  %68 = vmatpush1.bf16.xpose.msra.mxu0 %v59
  %69 = vmatprep.subr.bf16.mxu0 0
  %70 = vmatpush1.bf16.xpose.msra.mxu0 %v60
  %71 = vmatprep.subr.bf16.mxu0 0
  %72 = vmatpush1.bf16.xpose.msra.mxu0 %v61
  %73 = vmatprep.subr.bf16.mxu0 0
  %74 = vmatpush1.bf16.xpose.msra.mxu0 %v62
  %75 = vmatprep.subr.bf16.mxu0 0
  %76 = vmatpush1.bf16.xpose.msra.mxu0 %v63
  %77 = vmatprep.subr.bf16.mxu0 0
  %78 = vmatpush1.bf16.xpose.msra.mxu0 %v64
  %79 = vmatprep.subr.bf16.mxu0 0
  %80 = vmatpush1.bf16.xpose.msra.mxu0 %v65
  %81 = vmatprep.subr.bf16.mxu0 0
  %82 = vmatpush1.bf16.xpose.msra.mxu0 %v66
  %83 = vmatprep.subr.bf16.mxu0 0
  %84 = vmatpush1.bf16.xpose.msra.mxu0 0
  %85 = vmatprep.subr.bf16.mxu0 0
  %86 = vmatpush1.bf16.xpose.msra.mxu0 0
  %87 = vmatprep.subr.bf16.mxu0 0
  %88 = vmatpush1.bf16.xpose.msra.mxu0 0
  %89 = vmatprep.subr.bf16.mxu0 0
  %90 = vmatpush1.bf16.xpose.msra.mxu0 0
  %91 = vmatprep.subr.bf16.mxu0 0
  %92 = vmatpush1.bf16.xpose.msra.mxu0 0
  %93 = vmatprep.subr.bf16.mxu0 0
  %94 = vmatpush1.bf16.xpose.msra.mxu0 0
  %95 = vmatprep.subr.bf16.mxu0 0
  %96 = vmatpush1.bf16.xpose.msra.mxu0 0
  %97 = vmatprep.subr.bf16.mxu0 0
  %98 = vmatpush1.bf16.xpose.msra.mxu0 0
  %99 = vmatprep.mubr.bf16.mxu0 0
  %100 = vmatmul.mubr.bf16.gmra.mrb[0].mxu0 %v57
  %v101 = vpop.f32.mrb[0].mxu0
  %v102 = vadd.f32 0.0, %v101
  %v103 = vpop.f32.mrb[0].mxu0
  %v104 = vpop.f32.mrb[0].mxu0
  %v105 = vadd.f32 0.0, %v104
  %v106 = vpop.f32.mrb[0].mxu0
  %107 = vmatprep.mubr.bf16.mxu0 0
  %108 = vmatmul.mubr.bf16.gmra.mrb[0].mxu0 %v58
  %v109 = vpop.f32.mrb[0].mxu0
  %v110 = vadd.f32 0.0, %v109
  %v111 = vpop.f32.mrb[0].mxu0
  %v112 = vpop.f32.mrb[0].mxu0
  %v113 = vadd.f32 0.0, %v112
  %v114 = vpop.f32.mrb[0].mxu0
  %115 = vdwg.mxu0
  %v116 = vmul.f32 %v102, 2.0
  %v117 = vmul.f32 %v105, 2.0
  %v118 = vmul.f32 %v110, 2.0
  %v119 = vmul.f32 %v113, 2.0
  %v120 = vsub.f32 %v50, %v116
  %v121 = vsub.f32 %v52, %v117
  %v122 = vsub.f32 %v54, %v118
  %v123 = vsub.f32 %v56, %v119
  %v125 = vlaneseq
  %v126 = vshrl.u32 %v125, 7
  %v127 = vsub.s32 0, %v126
  %v128 = vrot.slane %v44, %v127
  %v130 = vadd.f32 %v120, %v128
  %v131 = vadd.f32 %v121, %v128
  %v132 = vadd.f32 %v122, %v128
  %v133 = vadd.f32 %v123, %v128
  %134 = vmin.xlane.f32.xlu0 %v130
  %v135 = vpop.xlane.xlu0 %134
  %136 = vmin.xlane.f32.xlu0 %v131
  %v137 = vpop.xlane.xlu0 %136
  %138 = vmin.xlane.f32.xlu0 %v132
  %v139 = vpop.xlane.xlu0 %138
  %140 = vmin.xlane.f32.xlu0 %v133
  %v141 = vpop.xlane.xlu0 %140
  %v142 = vlaneseq
  %v143 = vand.u32 %v142, 127
  %vm144 = vcmp.le.f32.partialorder %v130, %v135
  %vm145 = vcmp.le.f32.partialorder %v131, %v137
  %vm146 = vcmp.le.f32.partialorder %v132, %v139
  %vm147 = vcmp.le.f32.partialorder %v133, %v141
  %v148 = vsel %vm144, %v143, 128
  %v149 = vsel %vm145, %v143, 128
  %v150 = vsel %vm146, %v143, 128
  %v151 = vsel %vm147, %v143, 128
  %v152 = vand.u32 %v148, 65535
  %v153 = vshra.s32 %v148, 16
  %v154 = vcvt.s32.f32 %v152
  %v155 = vcvt.s32.f32 %v153
  %156 = vmin.xlane.f32.xlu0 %v155
  %v157 = vpop.xlane.xlu0 %156
  %vm158 = vcmp.eq.f32.partialorder %v155, %v157
  %v159 = vsel %vm158, %v154, inf
  %160 = vmin.xlane.f32.xlu0 %v159
  %v161 = vpop.xlane.xlu0 %160
  %v162 = vcvt.f32.s32 %v161
  %v163 = vcvt.f32.s32 %v157
  %v164 = vshll.u32 %v163, 16
  %v165 = vadd.s32 %v164, %v162
  %v166 = vand.u32 %v149, 65535
  %v167 = vshra.s32 %v149, 16
  %v168 = vcvt.s32.f32 %v166
  %v169 = vcvt.s32.f32 %v167
  %170 = vmin.xlane.f32.xlu0 %v169
  %v171 = vpop.xlane.xlu0 %170
  %vm172 = vcmp.eq.f32.partialorder %v169, %v171
  %v173 = vsel %vm172, %v168, inf
  %174 = vmin.xlane.f32.xlu0 %v173
  %v175 = vpop.xlane.xlu0 %174
  %v176 = vcvt.f32.s32 %v175
  %v177 = vcvt.f32.s32 %v171
  %v178 = vshll.u32 %v177, 16
  %v179 = vadd.s32 %v178, %v176
  %v180 = vand.u32 %v150, 65535
  %v181 = vshra.s32 %v150, 16
  %v182 = vcvt.s32.f32 %v180
  %v183 = vcvt.s32.f32 %v181
  %184 = vmin.xlane.f32.xlu0 %v183
  %v185 = vpop.xlane.xlu0 %184
  %vm186 = vcmp.eq.f32.partialorder %v183, %v185
  %v187 = vsel %vm186, %v182, inf
  %188 = vmin.xlane.f32.xlu0 %v187
  %v189 = vpop.xlane.xlu0 %188
  %v190 = vcvt.f32.s32 %v189
  %v191 = vcvt.f32.s32 %v185
  %v192 = vshll.u32 %v191, 16
  %v193 = vadd.s32 %v192, %v190
  %v194 = vand.u32 %v151, 65535
  %v195 = vshra.s32 %v151, 16
  %v196 = vcvt.s32.f32 %v194
  %v197 = vcvt.s32.f32 %v195
  %198 = vmin.xlane.f32.xlu0 %v197
  %v199 = vpop.xlane.xlu0 %198
  %vm200 = vcmp.eq.f32.partialorder %v197, %v199
  %v201 = vsel %vm200, %v196, inf
  %202 = vmin.xlane.f32.xlu0 %v201
  %v203 = vpop.xlane.xlu0 %202
  %v204 = vcvt.f32.s32 %v203
  %v205 = vcvt.f32.s32 %v199
  %v206 = vshll.u32 %v205, 16
  %v207 = vadd.s32 %v206, %v204
  %vm208 = vcmp.eq.s32.totalorder %v143, %v165
  %vm209 = vcmp.eq.s32.totalorder %v143, %v179
  %vm210 = vcmp.eq.s32.totalorder %v143, %v193
  %vm211 = vcmp.eq.s32.totalorder %v143, %v207
  %v212 = vsel %vm208, 1, 0
  %v213 = vsel %vm209, 1, 0
  %v214 = vsel %vm210, 1, 0
  %v215 = vsel %vm211, 1, 0
  %v216 = vcvt.s32.f32 %v212
  %v217 = vcvt.s32.f32 %v213
  %v218 = vcvt.s32.f32 %v214
  %v219 = vcvt.s32.f32 %v215
  %220 = vmatprep.subr.mxu0 0.0
  %221 = vmatpush1.msra.mxu0 %v28
  %222 = vmatprep.subr.mxu0 0.0
  %223 = vmatpush1.msra.mxu0 %v29
  %224 = vmatprep.subr.mxu0 0.0
  %225 = vmatpush1.msra.mxu0 %v30
  %226 = vmatprep.subr.mxu0 0.0
  %227 = vmatpush1.msra.mxu0 %v31
  %228 = vmatprep.subr.mxu0 0.0
  %229 = vmatpush1.msra.mxu0 %v32
  %230 = vmatprep.subr.mxu0 0.0
  %231 = vmatpush1.msra.mxu0 %v33
  %232 = vmatprep.subr.mxu0 0.0
  %233 = vmatpush1.msra.mxu0 %v34
  %234 = vmatprep.subr.mxu0 0.0
  %235 = vmatpush1.msra.mxu0 %v35
  %236 = vmatprep.subr.mxu0 0.0
  %237 = vmatpush1.msra.mxu0 %v36
  %238 = vmatprep.subr.mxu0 0.0
  %239 = vmatpush1.msra.mxu0 %v37
  %240 = vmatprep.subr.mxu0 0.0
  %241 = vmatpush1.msra.mxu0 %v38
  %242 = vmatprep.subr.mxu0 0.0
  %243 = vmatpush1.msra.mxu0 %v39
  %244 = vmatprep.subr.mxu0 0.0
  %245 = vmatpush1.msra.mxu0 %v40
  %246 = vmatprep.subr.mxu0 0.0
  %247 = vmatpush1.msra.mxu0 %v41
  %248 = vmatprep.subr.mxu0 0.0
  %249 = vmatpush1.msra.mxu0 %v42
  %250 = vmatprep.subr.mxu0 0.0
  %251 = vmatpush1.msra.mxu0 %v43
  %252 = vmatprep.subr.mxu0 0.0
  %253 = vmatpush1.msra.mxu0 0.0
  %254 = vmatprep.subr.mxu0 0.0
  %255 = vmatpush1.msra.mxu0 0.0
  %256 = vmatprep.subr.mxu0 0.0
  %257 = vmatpush1.msra.mxu0 0.0
  %258 = vmatprep.subr.mxu0 0.0
  %259 = vmatpush1.msra.mxu0 0.0
  %260 = vmatprep.subr.mxu0 0.0
  %261 = vmatpush1.msra.mxu0 0.0
  %262 = vmatprep.subr.mxu0 0.0
  %263 = vmatpush1.msra.mxu0 0.0
  %264 = vmatprep.subr.mxu0 0.0
  %265 = vmatpush1.msra.mxu0 0.0
  %266 = vmatprep.subr.mxu0 0.0
  %267 = vmatpush1.msra.mxu0 0.0
  %268 = vmatprep.subr.mxu0 0.0
  %269 = vmatpush1.msra.mxu0 0.0
  %270 = vmatprep.subr.mxu0 0.0
  %271 = vmatpush1.msra.mxu0 0.0
  %272 = vmatprep.subr.mxu0 0.0
  %273 = vmatpush1.msra.mxu0 0.0
  %274 = vmatprep.subr.mxu0 0.0
  %275 = vmatpush1.msra.mxu0 0.0
  %276 = vmatprep.subr.mxu0 0.0
  %277 = vmatpush1.msra.mxu0 0.0
  %278 = vmatprep.subr.mxu0 0.0
  %279 = vmatpush1.msra.mxu0 0.0
  %280 = vmatprep.subr.mxu0 0.0
  %281 = vmatpush1.msra.mxu0 0.0
  %282 = vmatprep.subr.mxu0 0.0
  %283 = vmatpush1.msra.mxu0 0.0
  %284 = vmatprep.mubr.f32.mxu0 0.0
  %285 = vmatmul.mubr.f32.gmra.mrb[0].mxu0 %v216
  %v286 = vpop.f32.mrb[0].mxu0
  %v287 = vadd.f32 0.0, %v286
  %v288 = vpop.f32.mrb[0].mxu0
  %289 = vmatprep.mubr.f32.mxu0 0.0
  %290 = vmatmul.mubr.f32.gmra.mrb[0].mxu0 %v217
  %v291 = vpop.f32.mrb[0].mxu0
  %v292 = vadd.f32 0.0, %v291
  %v293 = vpop.f32.mrb[0].mxu0
  %294 = vmatprep.mubr.f32.mxu0 0.0
  %295 = vmatmul.mubr.f32.gmra.mrb[0].mxu0 %v218
  %v296 = vpop.f32.mrb[0].mxu0
  %v297 = vadd.f32 0.0, %v296
  %v298 = vpop.f32.mrb[0].mxu0
  %299 = vmatprep.mubr.f32.mxu0 0.0
  %300 = vmatmul.mubr.f32.gmra.mrb[0].mxu0 %v219
  %v301 = vpop.f32.mrb[0].mxu0
  %v302 = vadd.f32 0.0, %v301
  %v303 = vpop.f32.mrb[0].mxu0
  %304 = vdwg.mxu0
  %305 = vst [vmem:[%s3] sm:$0xff] %v287
  %306 = vst [vmem:[%s3 + $0x8] sm:$0xff] %v292
  %307 = vst [vmem:[%s3 + $0x10] sm:$0xff] %v297
  %308 = vst [vmem:[%s3 + $0x18] sm:$0xff] %v302
  %v309 = vlaneseq
  %v310 = vshrl.u32 %v309, 7
  %v311 = vadd.s32 %v310, 8
  %v312 = vadd.s32 %v310, 16
  %v313 = vadd.s32 %v310, 24
  %s314 = smul.u32 0, 32
  %v315 = vstv %s314
  %v316 = vadd.s32 %v310, %v315
  %v317 = vadd.s32 %v311, %v315
  %v318 = vadd.s32 %v312, %v315
  %v319 = vadd.s32 %v313, %v315
  %vm320 = vcmp.lt.s32.totalorder %v316, 32
  %vm321 = vcmp.lt.s32.totalorder %v317, 32
  %vm322 = vcmp.lt.s32.totalorder %v318, 32
  %vm323 = vcmp.lt.s32.totalorder %v319, 32
  %v324 = vsel %vm320, 1, 0
  %v325 = vsel %vm321, 1, 0
  %v326 = vsel %vm322, 1, 0
  %v327 = vsel %vm323, 1, 0
  %v328 = vcvt.s32.f32 %v324
  %v329 = vcvt.s32.f32 %v325
  %v330 = vcvt.s32.f32 %v326
  %v331 = vcvt.s32.f32 %v327
  %v332 = vld [vmem:[%s4] sm:$0x1]
  %v333 = vmul.f32 %v216, %v328
  %v334 = vmul.f32 %v217, %v329
  %v335 = vmul.f32 %v218, %v330
  %v336 = vmul.f32 %v219, %v331
  %v337 = vadd.f32 %v333, %v334
  %v338 = vadd.f32 %v337, %v335
  %v339 = vadd.f32 %v338, %v336
  %v340 = vrot.slane %v339, 4
  %v341 = vadd.f32 %v339, %v340
  %v342 = vrot.slane %v341, 2
  %v343 = vadd.f32 %v341, %v342
  %v344 = vrot.slane %v343, 1
  %v345 = vadd.f32 %v343, %v344
  %v346 = vadd.f32 %v332, %v345
  %347 = vst [vmem:[%s4] sm:$0x1] %v346
  %v348 = vsub.f32 %v287, %v24
  %v349 = vsub.f32 %v292, %v25
  %v350 = vsub.f32 %v297, %v26
  %v351 = vsub.f32 %v302, %v27
  %v352 = vmul.f32 %v348, %v348
  %v353 = vmul.f32 %v349, %v349
  %v354 = vmul.f32 %v350, %v350
  %v355 = vmul.f32 %v351, %v351
  %356 = vadd.xlane.f32.xlu0 %v352
  %v357 = vpop.xlane.xlu0 %356
  %358 = vadd.xlane.f32.xlu0 %v353
  %v359 = vpop.xlane.xlu0 %358
  %360 = vadd.xlane.f32.xlu0 %v354
  %v361 = vpop.xlane.xlu0 %360
  %362 = vadd.xlane.f32.xlu0 %v355
  %v363 = vpop.xlane.xlu0 %362
  %v364 = vld [vmem:[%s5] sm:$0x1]
  %v365 = vmul.f32 %v357, %v328
  %v366 = vmul.f32 %v359, %v329
  %v367 = vmul.f32 %v361, %v330
  %v368 = vmul.f32 %v363, %v331
  %vm369 = vcmask 7168
  %v370 = vsel %vm369, %v365, 0.0
  %v371 = vsel %vm369, %v366, 0.0
  %v372 = vadd.f32 %v370, %v371
  %v373 = vsel %vm369, %v367, 0.0
  %v374 = vadd.f32 %v372, %v373
  %v375 = vsel %vm369, %v368, 0.0
  %v376 = vadd.f32 %v374, %v375
  %377 = vadd.xlane.f32.xlu0 %v376
  %v378 = vpop.xlane.xlu0 %377
  %v379 = vrot.slane %v378, 4
  %v380 = vadd.f32 %v378, %v379
  %v381 = vrot.slane %v380, 2
  %v382 = vadd.f32 %v380, %v381
  %v383 = vrot.slane %v382, 1
  %v384 = vadd.f32 %v382, %v383
  %s385 = vtos %v384
  %v386 = vstv %s385
  %v387 = vadd.f32 %v364, %v386
  %388 = vst [vmem:[%s5] sm:$0x1] %v387
  // Predicated region
  $region18: #{vqvae_forward.7} parent=0 // pred_check
    _
  $region19: #{vqvae_forward.7} parent=0 // pred_check_branch
    %390 = sbr.rel (0) target = $region21
  $region20: #{vqvae_forward.7} parent=0 // pred_region
    _
  $region21: #{vqvae_forward.7} parent=0 // pred_fallthru
    _
  // Predicated region
  $region22: #{vqvae_forward.7} parent=0 // pred_check
    _
  $region23: #{vqvae_forward.7} parent=0 // pred_check_branch
    %392 = sbr.rel (0) target = $region25
  $region24: #{vqvae_forward.7} parent=0 // pred_region
    _
  $region25: #{vqvae_forward.7} parent=0 // pred_fallthru
    _
  // Predicated region
  $region26: #{vqvae_forward.7} parent=0 // pred_check
    _
  $region27: #{vqvae_forward.7} parent=0 // pred_check_branch
    %394 = sbr.rel (0) target = $region29
  $region28: #{vqvae_forward.7} parent=0 // pred_region
    _
  $region29: #{vqvae_forward.7} parent=0 // pred_fallthru
    _
  // Predicated region
  $region30: #{vqvae_forward.7} parent=0 // pred_check
    _
  $region31: #{vqvae_forward.7} parent=0 // pred_check_branch
    %396 = sbr.rel (0) target = $region33
  $region32: #{vqvae_forward.7} parent=0 // pred_region
    _
  $region33: #{vqvae_forward.7} parent=0 // pred_fallthru
    _
  // Predicated region
  $region34: #{vqvae_forward.7} parent=0 // pred_check
    _
  $region35: #{vqvae_forward.7} parent=0 // pred_check_branch
    %398 = sbr.rel (0) target = $region37
  $region36: #{vqvae_forward.7} parent=0 // pred_region
    _
  $region37: #{vqvae_forward.7} parent=0 // pred_fallthru
    _
  // Predicated region
  $region38: #{vqvae_forward.7} parent=0 // pred_check
    _
  $region39: #{vqvae_forward.7} parent=0 // pred_check_branch
    %400 = sbr.rel (0) target = $region41
  $region40: #{vqvae_forward.7} parent=0 // pred_region
    _
  $region41: #{vqvae_forward.7} parent=0 // pred_fallthru
    _

// kernel: vqvae_forward.9
$region0: #{vqvae_forward.9}
  #allocation0 [shape = 'u32[]', space=smem, size = 0x4, offset = 0x4, fixed_abs, tag = 'smem constant byte address 0x4 - core index']
  #allocation1 [shape = 'u32[144,128]{1,0:T(1,128)}', space=vmem, size = 0x12000, scoped, tag = 'internal scratch']
  #allocation2 [shape = 'f32[256,128]{1,0:T(8,128)}', space=vmem, size = 0x20000, scoped, tag = 'scratch operand']
  %s0 = inlined_call_operand.vmem [shape: bf16[512,128], index: 0, kind: input, shape index: {}]
  %s1 = inlined_call_operand.vmem [shape: bf16[128,128], index: 1, kind: input, shape index: {}]
  %s2 = inlined_call_operand.vmem [shape: f32[1,128], index: 2, kind: input, shape index: {}]
  %s3 = inlined_call_operand.vmem [shape: f32[512,128], index: 3, kind: output, shape index: {}]
  %s4 = sld [smem:[#allocation0]]
  $region53: #{vqvae_forward.9} parent=0
    _
  %s6 = ssub.s32 1, %s4
  %s7 = scalar_select 0, %s6, %s4
  loop: start=0, step=1, limit=4
  $region2: #{vqvae_forward.9} parent=0 // loop_pre_header
    _
  $region3: #{vqvae_forward.9} parent=0 // loop_header
    %s9 = sphi 0, %s13
    %p10 = scmp.ge.s32.totalorder %s9, 4
    %s16 = sphi 0, %s35
    %s17 = sphi 0, %s31
    %s18 = sphi 0, %s27
    %s19 = sphi 0, %s16
    %s20 = sphi 0, %s17
    %s21 = sphi 0, %s18
    %s22 = sphi 0, %s19
    %s23 = sphi 0, %s20
    %s24 = sphi 0, %s21
    %s40 = sphi 0, %s42
    %s43 = sphi 0, %s40
    %s44 = sphi 0, %s43
    %s60 = sphi 0, %s44
    %s68 = sphi 0, %s70
    %s71 = sphi 0, %s68
    %s72 = sphi 0, %s71
    %s88 = sphi 0, %s72
    %s94 = sphi 0, %s96
    %s97 = sphi 0, %s94
    %s98 = sphi 0, %s97
    %s114 = sphi 0, %s98
    %s122 = sphi 0, %s124
    %s125 = sphi 0, %s122
    %s126 = sphi 0, %s125
    %s142 = sphi 0, %s126
  $region4: #{vqvae_forward.9} parent=0 // loop_header_branch
    %12 = sbr.rel (%p10) target = $region8
  $region5: #{vqvae_forward.9} parent=0 // loop_body
    %s14 = ssub.s32 %s9, 1
    %s15 = ssub.s32 %s9, 2
    %s25 = sadd.s32 1, %s18
    %p26 = scmp.ge.s32.totalorder %s25, 1
    %s27 = scalar_select %p26, 0, %s25
    %s28 = sadd.s32 1, %s17
    %s29 = scalar_select %p26, %s28, %s17
    %p30 = scmp.ge.s32.totalorder %s29, 1
    %s31 = scalar_select %p30, 0, %s29
    %s32 = sadd.s32 1, %s16
    %s33 = scalar_select %p30, %s32, %s16
    %p34 = scmp.ge.s32.totalorder %s33, 2
    %s35 = scalar_select %p34, 0, %s33
    %s36 = ssub.s32 %s16, %s35
    %s37 = ssub.s32 %s18, %s27
    %s38 = sor.u32 %s36, %s37
    %p39 = scmp.eq.s32.totalorder %s38, 0
    %s41 = sadd.s32 %s40, 1
    %s42 = scalar_select %p39, %s40, %s41
    %p45 = pneg %p39
    %p46 = scmp.eq.s32.totalorder %s9, 1
    %p47 = por %p45, %p46
    %p48 = scmp.ne.s32.totalorder %s40, %s43
    %p49 = scmp.eq.s32.totalorder %s9, 0
    %p50 = por %p48, %p49
    %p51 = scmp.ne.s32.totalorder %s40, %s43
    %p52 = scmp.eq.s32.totalorder %s14, 1
    %p53 = por %p51, %p52
    %p54 = scmp.ne.s32.totalorder %s43, %s44
    %p55 = scmp.eq.s32.totalorder %s14, 0
    %p56 = por %p54, %p55
    %p57 = scmp.ne.s32.totalorder %s43, %s44
    %p58 = scmp.eq.s32.totalorder %s15, 1
    %p59 = por %p57, %p58
    %p61 = scmp.ne.s32.totalorder %s44, %s60
    %p62 = scmp.eq.s32.totalorder %s15, 0
    %p63 = por %p61, %p62
    %s64 = ssub.s32 %s18, %s27
    %s65 = ssub.s32 %s17, %s31
    %s66 = sor.u32 %s64, %s65
    %p67 = scmp.eq.s32.totalorder %s66, 0
    %s69 = sadd.s32 %s68, 1
    %s70 = scalar_select %p67, %s68, %s69
    %p73 = pneg %p67
    %p74 = scmp.eq.s32.totalorder %s9, 1
    %p75 = por %p73, %p74
    %p76 = scmp.ne.s32.totalorder %s68, %s71
    %p77 = scmp.eq.s32.totalorder %s9, 0
    %p78 = por %p76, %p77
    %p79 = scmp.ne.s32.totalorder %s68, %s71
    %p80 = scmp.eq.s32.totalorder %s14, 1
    %p81 = por %p79, %p80
    %p82 = scmp.ne.s32.totalorder %s71, %s72
    %p83 = scmp.eq.s32.totalorder %s14, 0
    %p84 = por %p82, %p83
    %p85 = scmp.ne.s32.totalorder %s71, %s72
    %p86 = scmp.eq.s32.totalorder %s15, 1
    %p87 = por %p85, %p86
    %p89 = scmp.ne.s32.totalorder %s72, %s88
    %p90 = scmp.eq.s32.totalorder %s15, 0
    %p91 = por %p89, %p90
    %s92 = ssub.s32 %s17, %s31
    %p93 = scmp.eq.s32.totalorder %s92, 0
    %s95 = sadd.s32 %s94, 1
    %s96 = scalar_select %p93, %s94, %s95
    %p99 = pneg %p93
    %p100 = scmp.eq.s32.totalorder %s9, 1
    %p101 = por %p99, %p100
    %p102 = scmp.ne.s32.totalorder %s94, %s97
    %p103 = scmp.eq.s32.totalorder %s9, 0
    %p104 = por %p102, %p103
    %p105 = scmp.ne.s32.totalorder %s94, %s97
    %p106 = scmp.eq.s32.totalorder %s14, 1
    %p107 = por %p105, %p106
    %p108 = scmp.ne.s32.totalorder %s97, %s98
    %p109 = scmp.eq.s32.totalorder %s14, 0
    %p110 = por %p108, %p109
    %p111 = scmp.ne.s32.totalorder %s97, %s98
    %p112 = scmp.eq.s32.totalorder %s15, 1
    %p113 = por %p111, %p112
    %p115 = scmp.ne.s32.totalorder %s98, %s114
    %p116 = scmp.eq.s32.totalorder %s15, 0
    %p117 = por %p115, %p116
    %s118 = ssub.s32 %s16, %s35
    %s119 = ssub.s32 %s17, %s31
    %s120 = sor.u32 %s118, %s119
    %p121 = scmp.eq.s32.totalorder %s120, 0
    %s123 = sadd.s32 %s122, 1
    %s124 = scalar_select %p121, %s122, %s123
    %p127 = pneg %p121
    %p128 = scmp.eq.s32.totalorder %s9, 1
    %p129 = por %p127, %p128
    %p130 = scmp.ne.s32.totalorder %s122, %s125
    %p131 = scmp.eq.s32.totalorder %s9, 0
    %p132 = por %p130, %p131
    %p133 = scmp.ne.s32.totalorder %s122, %s125
    %p134 = scmp.eq.s32.totalorder %s14, 1
    %p135 = por %p133, %p134
    %p136 = scmp.ne.s32.totalorder %s125, %s126
    %p137 = scmp.eq.s32.totalorder %s14, 0
    %p138 = por %p136, %p137
    %p139 = scmp.ne.s32.totalorder %s125, %s126
    %p140 = scmp.eq.s32.totalorder %s15, 1
    %p141 = por %p139, %p140
    %p143 = scmp.ne.s32.totalorder %s126, %s142
    %p144 = scmp.eq.s32.totalorder %s15, 0
    %p145 = por %p143, %p144
    %p146 = scmp.le.s32.totalorder 1, %s9
    %p147 = scmp.lt.s32.totalorder %s9, 3
    %p148 = pnand %p146, %p147
    %p149 = pneg %p148
    // Predicated region
    $region9: #{vqvae_forward.9} parent=5 // pred_check
      _
    $region10: #{vqvae_forward.9} parent=5 // pred_check_branch
      %151 = sbr.rel (%p148) target = $region12
    $region11: #{vqvae_forward.9} parent=5 // pred_region
      %s152 = ssub.s32 %s9, 1
      // Predicated region
      $region13: #{vqvae_forward.9} parent=11 // pred_check
        %p153 = pneg %p84
      $region14: #{vqvae_forward.9} parent=11 // pred_check_branch
        %155 = sbr.rel (%p153) target = $region16
      $region15: #{vqvae_forward.9} parent=11 // pred_region
        %s156 = smul.u32 16, %s21
        %p157 = scmp.lt.s32.totalorder %s156, 15
        %s158 = scalar_select %p157, %s156, 15
        %p159 = scmp.lt.s32.totalorder %s20, 0
        %s160 = scalar_select %p159, %s20, 0
        %s161 = sadd.s32 %s160, %s158
        %s162 = smul.addr %s161, 4
        %s163 = scalar_lea.vmem %s1, %s162
        %s164 = smul.u32 16, %s21
      $region16: #{vqvae_forward.9} parent=11 // pred_fallthru
        _
      // Predicated region
      $region17: #{vqvae_forward.9} parent=11 // pred_check
        %p165 = pneg %p110
      $region18: #{vqvae_forward.9} parent=11 // pred_check_branch
        %167 = sbr.rel (%p165) target = $region20
      $region19: #{vqvae_forward.9} parent=11 // pred_region
        %p168 = scmp.lt.s32.totalorder %s20, 0
        %s169 = scalar_select %p168, %s20, 0
        %s170 = scalar_lea.vmem %s2, %s169
      $region20: #{vqvae_forward.9} parent=11 // pred_fallthru
        _
    $region12: #{vqvae_forward.9} parent=5 // pred_fallthru
      _
    %p171 = scmp.lt.s32.totalorder %s9, 2
    // Predicated region
    $region21: #{vqvae_forward.9} parent=5 // pred_check
      %p172 = pneg %p171
    $region22: #{vqvae_forward.9} parent=5 // pred_check_branch
      %174 = sbr.rel (%p172) target = $region24
    $region23: #{vqvae_forward.9} parent=5 // pred_region
      // Predicated region
      $region25: #{vqvae_forward.9} parent=23 // pred_check
        %p175 = pneg %p50
      $region26: #{vqvae_forward.9} parent=23 // pred_check_branch
        %177 = sbr.rel (%p175) target = $region28
      $region27: #{vqvae_forward.9} parent=23 // pred_region
        %s178 = smul.u32 32, %s16
        %p179 = scmp.lt.s32.totalorder %s178, 63
        %s180 = scalar_select %p179, %s178, 63
        %p181 = scmp.lt.s32.totalorder %s18, 0
        %s182 = scalar_select %p181, %s18, 0
        %s183 = sadd.s32 %s182, %s180
        %s184 = smul.addr %s183, 4
        %s185 = scalar_lea.vmem %s0, %s184
        %s186 = smul.u32 32, %s16
      $region28: #{vqvae_forward.9} parent=23 // pred_fallthru
        _
    $region24: #{vqvae_forward.9} parent=5 // pred_fallthru
      _
    %p187 = scmp.le.s32.totalorder 1, %s9
    %p188 = scmp.lt.s32.totalorder %s9, 3
    %p189 = pnand %p187, %p188
    %p190 = pneg %p189
    // Predicated region
    $region29: #{vqvae_forward.9} parent=5 // pred_check
      _
    $region30: #{vqvae_forward.9} parent=5 // pred_check_branch
      %192 = sbr.rel (%p189) target = $region32
    $region31: #{vqvae_forward.9} parent=5 // pred_region
      %s193 = ssub.s32 %s9, 1
      %s194 = smul.u32 32, %s19
      %p195 = scmp.lt.s32.totalorder %s194, 63
      %s196 = scalar_select %p195, %s194, 63
      %p197 = scmp.lt.s32.totalorder %s21, 0
      %s198 = scalar_select %p197, %s21, 0
      %s199 = sadd.s32 %s198, %s196
      %s200 = smul.addr %s199, 4
      %s201 = scalar_lea.vmem %s0, %s200
      %p202 = pneg %p56
      %p203 = pneg %p53
      %s204 = smul.u32 16, %s21
      %p205 = scmp.lt.s32.totalorder %s204, 15
      %s206 = scalar_select %p205, %s204, 15
      %p207 = scmp.lt.s32.totalorder %s20, 0
      %s208 = scalar_select %p207, %s20, 0
      %s209 = sadd.s32 %s208, %s206
      %s210 = smul.addr %s209, 4
      %s211 = scalar_lea.vmem %s1, %s210
      %p212 = pneg %p84
      %p213 = pneg %p81
      %p214 = scmp.lt.s32.totalorder %s20, 0
      %s215 = scalar_select %p214, %s20, 0
      %s216 = scalar_lea.vmem %s2, %s215
      %p217 = pneg %p110
      %p218 = pneg %p107
      %p219 = pneg %p138
      %p220 = pneg %p135
      %s221 = smul.u32 32, %s19
      %p222 = scmp.lt.s32.totalorder %s221, 63
      %s223 = scalar_select %p222, %s221, 63
      %p224 = scmp.lt.s32.totalorder %s20, 0
      %s225 = scalar_select %p224, %s20, 0
      %s226 = sadd.s32 %s225, %s223
      %s227 = smul.addr %s226, 8
      %s228 = scalar_lea.vmem %s3, %s227
      %s229 = smul.u32 32, %s19
      %p230 = scmp.lt.s32.totalorder %s229, 63
      %s231 = scalar_select %p230, %s229, 63
      %p232 = scmp.lt.s32.totalorder %s21, 0
      %s233 = scalar_select %p232, %s21, 0
      %s234 = sadd.s32 %s233, %s231
      %s235 = smul.addr %s234, 4
      %s236 = scalar_lea.vmem %s0, %s235
      %s237 = smul.u32 32, %s19
      %s238 = smul.u32 16, %s21
      %p239 = scmp.lt.s32.totalorder %s238, 15
      %s240 = scalar_select %p239, %s238, 15
      %p241 = scmp.lt.s32.totalorder %s20, 0
      %s242 = scalar_select %p241, %s20, 0
      %s243 = sadd.s32 %s242, %s240
      %s244 = smul.addr %s243, 4
      %s245 = scalar_lea.vmem %s1, %s244
      %s246 = smul.u32 16, %s21
      %p247 = scmp.lt.s32.totalorder %s20, 0
      %s248 = scalar_select %p247, %s20, 0
      %s249 = scalar_lea.vmem %s2, %s248
      %s250 = smul.u32 32, %s19
      %p251 = scmp.lt.s32.totalorder %s250, 63
      %s252 = scalar_select %p251, %s250, 63
      %p253 = scmp.lt.s32.totalorder %s20, 0
      %s254 = scalar_select %p253, %s20, 0
      %s255 = sadd.s32 %s254, %s252
      %s256 = smul.addr %s255, 8
      %s257 = scalar_lea.vmem %s3, %s256
      %s258 = smul.u32 32, %s19
      %p260 = scmp.eq.s32.totalorder %s21, 0
      // Predicated region
      $region33: #{vqvae_forward.9} parent=31 // pred_check
        %p261 = pneg %p260
      $region34: #{vqvae_forward.9} parent=31 // pred_check_branch
        %263 = sbr.rel (%p261) target = $region36
      $region35: #{vqvae_forward.9} parent=31 // pred_region
        %264 = vst [vmem:[#allocation2] sm:$0xff] 0.0
        %265 = vst [vmem:[#allocation2 + $0x8] sm:$0xff] 0.0
        %266 = vst [vmem:[#allocation2 + $0x10] sm:$0xff] 0.0
        %267 = vst [vmem:[#allocation2 + $0x18] sm:$0xff] 0.0
        %268 = vst [vmem:[#allocation2 + $0x20] sm:$0xff] 0.0
        %269 = vst [vmem:[#allocation2 + $0x28] sm:$0xff] 0.0
        %270 = vst [vmem:[#allocation2 + $0x30] sm:$0xff] 0.0
        %271 = vst [vmem:[#allocation2 + $0x38] sm:$0xff] 0.0
        %272 = vst [vmem:[#allocation2 + $0x40] sm:$0xff] 0.0
        %273 = vst [vmem:[#allocation2 + $0x48] sm:$0xff] 0.0
        %274 = vst [vmem:[#allocation2 + $0x50] sm:$0xff] 0.0
        %275 = vst [vmem:[#allocation2 + $0x58] sm:$0xff] 0.0
        %276 = vst [vmem:[#allocation2 + $0x60] sm:$0xff] 0.0
        %277 = vst [vmem:[#allocation2 + $0x68] sm:$0xff] 0.0
        %278 = vst [vmem:[#allocation2 + $0x70] sm:$0xff] 0.0
        %279 = vst [vmem:[#allocation2 + $0x78] sm:$0xff] 0.0
        %280 = vst [vmem:[#allocation2 + $0x80] sm:$0xff] 0.0
        %281 = vst [vmem:[#allocation2 + $0x88] sm:$0xff] 0.0
        %282 = vst [vmem:[#allocation2 + $0x90] sm:$0xff] 0.0
        %283 = vst [vmem:[#allocation2 + $0x98] sm:$0xff] 0.0
        %284 = vst [vmem:[#allocation2 + $0xa0] sm:$0xff] 0.0
        %285 = vst [vmem:[#allocation2 + $0xa8] sm:$0xff] 0.0
        %286 = vst [vmem:[#allocation2 + $0xb0] sm:$0xff] 0.0
        %287 = vst [vmem:[#allocation2 + $0xb8] sm:$0xff] 0.0
        %288 = vst [vmem:[#allocation2 + $0xc0] sm:$0xff] 0.0
        %289 = vst [vmem:[#allocation2 + $0xc8] sm:$0xff] 0.0
        %290 = vst [vmem:[#allocation2 + $0xd0] sm:$0xff] 0.0
        %291 = vst [vmem:[#allocation2 + $0xd8] sm:$0xff] 0.0
        %292 = vst [vmem:[#allocation2 + $0xe0] sm:$0xff] 0.0
        %293 = vst [vmem:[#allocation2 + $0xe8] sm:$0xff] 0.0
        %294 = vst [vmem:[#allocation2 + $0xf0] sm:$0xff] 0.0
        %295 = vst [vmem:[#allocation2 + $0xf8] sm:$0xff] 0.0
      $region36: #{vqvae_forward.9} parent=31 // pred_fallthru
        _
      %v296 = vld [vmem:[#allocation2] sm:$0xff]
      %v297 = vld [vmem:[#allocation2 + $0x8] sm:$0xff]
      %v298 = vld [vmem:[#allocation2 + $0x10] sm:$0xff]
      %v299 = vld [vmem:[#allocation2 + $0x18] sm:$0xff]
      %v300 = vld [vmem:[#allocation2 + $0x20] sm:$0xff]
      %v301 = vld [vmem:[#allocation2 + $0x28] sm:$0xff]
      %v302 = vld [vmem:[#allocation2 + $0x30] sm:$0xff]
      %v303 = vld [vmem:[#allocation2 + $0x38] sm:$0xff]
      %v304 = vld [vmem:[#allocation2 + $0x40] sm:$0xff]
      %v305 = vld [vmem:[#allocation2 + $0x48] sm:$0xff]
      %v306 = vld [vmem:[#allocation2 + $0x50] sm:$0xff]
      %v307 = vld [vmem:[#allocation2 + $0x58] sm:$0xff]
      %v308 = vld [vmem:[#allocation2 + $0x60] sm:$0xff]
      %v309 = vld [vmem:[#allocation2 + $0x68] sm:$0xff]
      %v310 = vld [vmem:[#allocation2 + $0x70] sm:$0xff]
      %v311 = vld [vmem:[#allocation2 + $0x78] sm:$0xff]
      %v312 = vld [vmem:[#allocation2 + $0x80] sm:$0xff]
      %v313 = vld [vmem:[#allocation2 + $0x88] sm:$0xff]
      %v314 = vld [vmem:[#allocation2 + $0x90] sm:$0xff]
      %v315 = vld [vmem:[#allocation2 + $0x98] sm:$0xff]
      %v316 = vld [vmem:[#allocation2 + $0xa0] sm:$0xff]
      %v317 = vld [vmem:[#allocation2 + $0xa8] sm:$0xff]
      %v318 = vld [vmem:[#allocation2 + $0xb0] sm:$0xff]
      %v319 = vld [vmem:[#allocation2 + $0xb8] sm:$0xff]
      %v320 = vld [vmem:[#allocation2 + $0xc0] sm:$0xff]
      %v321 = vld [vmem:[#allocation2 + $0xc8] sm:$0xff]
      %v322 = vld [vmem:[#allocation2 + $0xd0] sm:$0xff]
      %v323 = vld [vmem:[#allocation2 + $0xd8] sm:$0xff]
      %v324 = vld [vmem:[#allocation2 + $0xe0] sm:$0xff]
      %v325 = vld [vmem:[#allocation2 + $0xe8] sm:$0xff]
      %v326 = vld [vmem:[#allocation2 + $0xf0] sm:$0xff]
      %v327 = vld [vmem:[#allocation2 + $0xf8] sm:$0xff]
      %v328 = vld [vmem:[%s236] sm:$0xf]
      %v329 = vld [vmem:[%s236 + $0x4] sm:$0xf]
      %v330 = vld [vmem:[%s236 + $0x8] sm:$0xf]
      %v331 = vld [vmem:[%s236 + $0xc] sm:$0xf]
      %v332 = vld [vmem:[%s236 + $0x10] sm:$0xf]
      %v333 = vld [vmem:[%s236 + $0x14] sm:$0xf]
      %v334 = vld [vmem:[%s236 + $0x18] sm:$0xf]
      %v335 = vld [vmem:[%s236 + $0x1c] sm:$0xf]
      %v336 = vld [vmem:[%s236 + $0x20] sm:$0xf]
      %v337 = vld [vmem:[%s236 + $0x24] sm:$0xf]
      %v338 = vld [vmem:[%s236 + $0x28] sm:$0xf]
      %v339 = vld [vmem:[%s236 + $0x2c] sm:$0xf]
      %v340 = vld [vmem:[%s236 + $0x30] sm:$0xf]
      %v341 = vld [vmem:[%s236 + $0x34] sm:$0xf]
      %v342 = vld [vmem:[%s236 + $0x38] sm:$0xf]
      %v343 = vld [vmem:[%s236 + $0x3c] sm:$0xf]
      %v344 = vld [vmem:[%s236 + $0x40] sm:$0xf]
      %v345 = vld [vmem:[%s236 + $0x44] sm:$0xf]
      %v346 = vld [vmem:[%s236 + $0x48] sm:$0xf]
      %v347 = vld [vmem:[%s236 + $0x4c] sm:$0xf]
      %v348 = vld [vmem:[%s236 + $0x50] sm:$0xf]
      %v349 = vld [vmem:[%s236 + $0x54] sm:$0xf]
      %v350 = vld [vmem:[%s236 + $0x58] sm:$0xf]
      %v351 = vld [vmem:[%s236 + $0x5c] sm:$0xf]
      %v352 = vld [vmem:[%s236 + $0x60] sm:$0xf]
      %v353 = vld [vmem:[%s236 + $0x64] sm:$0xf]
      %v354 = vld [vmem:[%s236 + $0x68] sm:$0xf]
      %v355 = vld [vmem:[%s236 + $0x6c] sm:$0xf]
      %v356 = vld [vmem:[%s236 + $0x70] sm:$0xf]
      %v357 = vld [vmem:[%s236 + $0x74] sm:$0xf]
      %v358 = vld [vmem:[%s236 + $0x78] sm:$0xf]
      %v359 = vld [vmem:[%s236 + $0x7c] sm:$0xf]
      %v360 = vld [vmem:[%s245] sm:$0xf]
      %v361 = vld [vmem:[%s245 + $0x4] sm:$0xf]
      %v362 = vld [vmem:[%s245 + $0x8] sm:$0xf]
      %v363 = vld [vmem:[%s245 + $0xc] sm:$0xf]
      %v364 = vld [vmem:[%s245 + $0x10] sm:$0xf]
      %v365 = vld [vmem:[%s245 + $0x14] sm:$0xf]
      %v366 = vld [vmem:[%s245 + $0x18] sm:$0xf]
      %v367 = vld [vmem:[%s245 + $0x1c] sm:$0xf]
      %v368 = vld [vmem:[%s245 + $0x20] sm:$0xf]
      %v369 = vld [vmem:[%s245 + $0x24] sm:$0xf]
      %v370 = vld [vmem:[%s245 + $0x28] sm:$0xf]
      %v371 = vld [vmem:[%s245 + $0x2c] sm:$0xf]
      %v372 = vld [vmem:[%s245 + $0x30] sm:$0xf]
      %v373 = vld [vmem:[%s245 + $0x34] sm:$0xf]
      %v374 = vld [vmem:[%s245 + $0x38] sm:$0xf]
      %v375 = vld [vmem:[%s245 + $0x3c] sm:$0xf]
      %v408 = vunpack.c.l.b16 %v328
      %v409 = vunpack.c.l.b16 %v329
      %v410 = vunpack.c.l.b16 %v330
      %v411 = vunpack.c.l.b16 %v331
      %v412 = vunpack.c.l.b16 %v332
      %v413 = vunpack.c.l.b16 %v333
      %v414 = vunpack.c.l.b16 %v334
      %v415 = vunpack.c.l.b16 %v335
      %v416 = vunpack.c.l.b16 %v336
      %v417 = vunpack.c.l.b16 %v337
      %v418 = vunpack.c.l.b16 %v338
      %v419 = vunpack.c.l.b16 %v339
      %v420 = vunpack.c.l.b16 %v340
      %v421 = vunpack.c.l.b16 %v341
      %v422 = vunpack.c.l.b16 %v342
      %v423 = vunpack.c.l.b16 %v343
      %v424 = vunpack.c.l.b16 %v344
      %v425 = vunpack.c.l.b16 %v345
      %v426 = vunpack.c.l.b16 %v346
      %v427 = vunpack.c.l.b16 %v347
      %v428 = vunpack.c.l.b16 %v348
      %v429 = vunpack.c.l.b16 %v349
      %v430 = vunpack.c.l.b16 %v350
      %v431 = vunpack.c.l.b16 %v351
      %v432 = vunpack.c.l.b16 %v352
      %v433 = vunpack.c.l.b16 %v353
      %v434 = vunpack.c.l.b16 %v354
      %v435 = vunpack.c.l.b16 %v355
      %v436 = vunpack.c.l.b16 %v356
      %v437 = vunpack.c.l.b16 %v357
      %v438 = vunpack.c.l.b16 %v358
      %v439 = vunpack.c.l.b16 %v359
      %v440 = vpack.c.b16 %v409, %v408
      %v441 = vpack.c.b16 %v411, %v410
      %v442 = vpack.c.b16 %v413, %v412
      %v443 = vpack.c.b16 %v415, %v414
      %v444 = vpack.c.b16 %v417, %v416
      %v445 = vpack.c.b16 %v419, %v418
      %v446 = vpack.c.b16 %v421, %v420
      %v447 = vpack.c.b16 %v423, %v422
      %v448 = vpack.c.b16 %v425, %v424
      %v449 = vpack.c.b16 %v427, %v426
      %v450 = vpack.c.b16 %v429, %v428
      %v451 = vpack.c.b16 %v431, %v430
      %v452 = vpack.c.b16 %v433, %v432
      %v453 = vpack.c.b16 %v435, %v434
      %v454 = vpack.c.b16 %v437, %v436
      %v455 = vpack.c.b16 %v439, %v438
      %v488 = vunpack.c.l.b16 %v360
      %v489 = vunpack.c.l.b16 %v361
      %v490 = vunpack.c.l.b16 %v362
      %v491 = vunpack.c.l.b16 %v363
      %v492 = vunpack.c.l.b16 %v364
      %v493 = vunpack.c.l.b16 %v365
      %v494 = vunpack.c.l.b16 %v366
      %v495 = vunpack.c.l.b16 %v367
      %v496 = vunpack.c.l.b16 %v368
      %v497 = vunpack.c.l.b16 %v369
      %v498 = vunpack.c.l.b16 %v370
      %v499 = vunpack.c.l.b16 %v371
      %v500 = vunpack.c.l.b16 %v372
      %v501 = vunpack.c.l.b16 %v373
      %v502 = vunpack.c.l.b16 %v374
      %v503 = vunpack.c.l.b16 %v375
      %v504 = vpack.c.b16 %v489, %v488
      %v505 = vpack.c.b16 %v491, %v490
      %v506 = vpack.c.b16 %v493, %v492
      %v507 = vpack.c.b16 %v495, %v494
      %v508 = vpack.c.b16 %v497, %v496
      %v509 = vpack.c.b16 %v499, %v498
      %v510 = vpack.c.b16 %v501, %v500
      %v511 = vpack.c.b16 %v503, %v502
      %520 = vmatprep.subr.bf16.mxu0 0
      %521 = vmatpush1.bf16.msra.mxu0 %v504
      %522 = vmatprep.subr.bf16.mxu0 0
      %523 = vmatpush1.bf16.msra.mxu0 %v505
      %524 = vmatprep.subr.bf16.mxu0 0
      %525 = vmatpush1.bf16.msra.mxu0 %v506
      %526 = vmatprep.subr.bf16.mxu0 0
      %527 = vmatpush1.bf16.msra.mxu0 %v507
      %528 = vmatprep.subr.bf16.mxu0 0
      %529 = vmatpush1.bf16.msra.mxu0 %v508
      %530 = vmatprep.subr.bf16.mxu0 0
      %531 = vmatpush1.bf16.msra.mxu0 %v509
      %532 = vmatprep.subr.bf16.mxu0 0
      %533 = vmatpush1.bf16.msra.mxu0 %v510
      %534 = vmatprep.subr.bf16.mxu0 0
      %535 = vmatpush1.bf16.msra.mxu0 %v511
      %536 = vmatprep.subr.bf16.mxu0 0
      %537 = vmatpush1.bf16.msra.mxu0 0
      %538 = vmatprep.subr.bf16.mxu0 0
      %539 = vmatpush1.bf16.msra.mxu0 0
      %540 = vmatprep.subr.bf16.mxu0 0
      %541 = vmatpush1.bf16.msra.mxu0 0
      %542 = vmatprep.subr.bf16.mxu0 0
      %543 = vmatpush1.bf16.msra.mxu0 0
      %544 = vmatprep.subr.bf16.mxu0 0
      %545 = vmatpush1.bf16.msra.mxu0 0
      %546 = vmatprep.subr.bf16.mxu0 0
      %547 = vmatpush1.bf16.msra.mxu0 0
      %548 = vmatprep.subr.bf16.mxu0 0
      %549 = vmatpush1.bf16.msra.mxu0 0
      %550 = vmatprep.subr.bf16.mxu0 0
      %551 = vmatpush1.bf16.msra.mxu0 0
      %552 = vmatprep.mubr.bf16.mxu0 0
      %553 = vmatmul.mubr.bf16.gmra.mrb[0].mxu0 %v440
      %v554 = vpop.f32.mrb[0].mxu0
      %v555 = vadd.f32 0.0, %v554
      %v556 = vpop.f32.mrb[0].mxu0
      %v557 = vpop.f32.mrb[0].mxu0
      %v558 = vadd.f32 0.0, %v557
      %v559 = vpop.f32.mrb[0].mxu0
      %560 = vmatprep.mubr.bf16.mxu0 0
      %561 = vmatmul.mubr.bf16.gmra.mrb[0].mxu0 %v441
      %v562 = vpop.f32.mrb[0].mxu0
      %v563 = vadd.f32 0.0, %v562
      %v564 = vpop.f32.mrb[0].mxu0
      %v565 = vpop.f32.mrb[0].mxu0
      %v566 = vadd.f32 0.0, %v565
      %v567 = vpop.f32.mrb[0].mxu0
      %568 = vmatprep.mubr.bf16.mxu0 0
      %569 = vmatmul.mubr.bf16.gmra.mrb[0].mxu0 %v442
      %v570 = vpop.f32.mrb[0].mxu0
      %v571 = vadd.f32 0.0, %v570
      %v572 = vpop.f32.mrb[0].mxu0
      %v573 = vpop.f32.mrb[0].mxu0
      %v574 = vadd.f32 0.0, %v573
      %v575 = vpop.f32.mrb[0].mxu0
      %576 = vmatprep.mubr.bf16.mxu0 0
      %577 = vmatmul.mubr.bf16.gmra.mrb[0].mxu0 %v443
      %v578 = vpop.f32.mrb[0].mxu0
      %v579 = vadd.f32 0.0, %v578
      %v580 = vpop.f32.mrb[0].mxu0
      %v581 = vpop.f32.mrb[0].mxu0
      %v582 = vadd.f32 0.0, %v581
      %v583 = vpop.f32.mrb[0].mxu0
      %584 = vmatprep.mubr.bf16.mxu0 0
      %585 = vmatmul.mubr.bf16.gmra.mrb[0].mxu0 %v444
      %v586 = vpop.f32.mrb[0].mxu0
      %v587 = vadd.f32 0.0, %v586
      %v588 = vpop.f32.mrb[0].mxu0
      %v589 = vpop.f32.mrb[0].mxu0
      %v590 = vadd.f32 0.0, %v589
      %v591 = vpop.f32.mrb[0].mxu0
      %592 = vmatprep.mubr.bf16.mxu0 0
      %593 = vmatmul.mubr.bf16.gmra.mrb[0].mxu0 %v445
      %v594 = vpop.f32.mrb[0].mxu0
      %v595 = vadd.f32 0.0, %v594
      %v596 = vpop.f32.mrb[0].mxu0
      %v597 = vpop.f32.mrb[0].mxu0
      %v598 = vadd.f32 0.0, %v597
      %v599 = vpop.f32.mrb[0].mxu0
      %600 = vmatprep.mubr.bf16.mxu0 0
      %601 = vmatmul.mubr.bf16.gmra.mrb[0].mxu0 %v446
      %v602 = vpop.f32.mrb[0].mxu0
      %v603 = vadd.f32 0.0, %v602
      %v604 = vpop.f32.mrb[0].mxu0
      %v605 = vpop.f32.mrb[0].mxu0
      %v606 = vadd.f32 0.0, %v605
      %v607 = vpop.f32.mrb[0].mxu0
      %608 = vmatprep.mubr.bf16.mxu0 0
      %609 = vmatmul.mubr.bf16.gmra.mrb[0].mxu0 %v447
      %v610 = vpop.f32.mrb[0].mxu0
      %v611 = vadd.f32 0.0, %v610
      %v612 = vpop.f32.mrb[0].mxu0
      %v613 = vpop.f32.mrb[0].mxu0
      %v614 = vadd.f32 0.0, %v613
      %v615 = vpop.f32.mrb[0].mxu0
      %616 = vmatprep.mubr.bf16.mxu0 0
      %617 = vmatmul.mubr.bf16.gmra.mrb[0].mxu0 %v448
      %v618 = vpop.f32.mrb[0].mxu0
      %v619 = vadd.f32 0.0, %v618
      %v620 = vpop.f32.mrb[0].mxu0
      %v621 = vpop.f32.mrb[0].mxu0
      %v622 = vadd.f32 0.0, %v621
      %v623 = vpop.f32.mrb[0].mxu0
      %624 = vmatprep.mubr.bf16.mxu0 0
      %625 = vmatmul.mubr.bf16.gmra.mrb[0].mxu0 %v449
      %v626 = vpop.f32.mrb[0].mxu0
      %v627 = vadd.f32 0.0, %v626
      %v628 = vpop.f32.mrb[0].mxu0
      %v629 = vpop.f32.mrb[0].mxu0
      %v630 = vadd.f32 0.0, %v629
      %v631 = vpop.f32.mrb[0].mxu0
      %632 = vmatprep.mubr.bf16.mxu0 0
      %633 = vmatmul.mubr.bf16.gmra.mrb[0].mxu0 %v450
      %v634 = vpop.f32.mrb[0].mxu0
      %v635 = vadd.f32 0.0, %v634
      %v636 = vpop.f32.mrb[0].mxu0
      %v637 = vpop.f32.mrb[0].mxu0
      %v638 = vadd.f32 0.0, %v637
      %v639 = vpop.f32.mrb[0].mxu0
      %640 = vmatprep.mubr.bf16.mxu0 0
      %641 = vmatmul.mubr.bf16.gmra.mrb[0].mxu0 %v451
      %v642 = vpop.f32.mrb[0].mxu0
      %v643 = vadd.f32 0.0, %v642
      %v644 = vpop.f32.mrb[0].mxu0
      %v645 = vpop.f32.mrb[0].mxu0
      %v646 = vadd.f32 0.0, %v645
      %v647 = vpop.f32.mrb[0].mxu0
      %648 = vmatprep.mubr.bf16.mxu0 0
      %649 = vmatmul.mubr.bf16.gmra.mrb[0].mxu0 %v452
      %v650 = vpop.f32.mrb[0].mxu0
      %v651 = vadd.f32 0.0, %v650
      %v652 = vpop.f32.mrb[0].mxu0
      %v653 = vpop.f32.mrb[0].mxu0
      %v654 = vadd.f32 0.0, %v653
      %v655 = vpop.f32.mrb[0].mxu0
      %656 = vmatprep.mubr.bf16.mxu0 0
      %657 = vmatmul.mubr.bf16.gmra.mrb[0].mxu0 %v453
      %v658 = vpop.f32.mrb[0].mxu0
      %v659 = vadd.f32 0.0, %v658
      %v660 = vpop.f32.mrb[0].mxu0
      %v661 = vpop.f32.mrb[0].mxu0
      %v662 = vadd.f32 0.0, %v661
      %v663 = vpop.f32.mrb[0].mxu0
      %664 = vmatprep.mubr.bf16.mxu0 0
      %665 = vmatmul.mubr.bf16.gmra.mrb[0].mxu0 %v454
      %v666 = vpop.f32.mrb[0].mxu0
      %v667 = vadd.f32 0.0, %v666
      %v668 = vpop.f32.mrb[0].mxu0
      %v669 = vpop.f32.mrb[0].mxu0
      %v670 = vadd.f32 0.0, %v669
      %v671 = vpop.f32.mrb[0].mxu0
      %672 = vmatprep.mubr.bf16.mxu0 0
      %673 = vmatmul.mubr.bf16.gmra.mrb[0].mxu0 %v455
      %v674 = vpop.f32.mrb[0].mxu0
      %v675 = vadd.f32 0.0, %v674
      %v676 = vpop.f32.mrb[0].mxu0
      %v677 = vpop.f32.mrb[0].mxu0
      %v678 = vadd.f32 0.0, %v677
      %v679 = vpop.f32.mrb[0].mxu0
      %680 = vdwg.mxu0
      %v681 = vadd.f32 %v296, %v555
      %v682 = vadd.f32 %v297, %v558
      %v683 = vadd.f32 %v298, %v563
      %v684 = vadd.f32 %v299, %v566
      %v685 = vadd.f32 %v300, %v571
      %v686 = vadd.f32 %v301, %v574
      %v687 = vadd.f32 %v302, %v579
      %v688 = vadd.f32 %v303, %v582
      %v689 = vadd.f32 %v304, %v587
      %v690 = vadd.f32 %v305, %v590
      %v691 = vadd.f32 %v306, %v595
      %v692 = vadd.f32 %v307, %v598
      %v693 = vadd.f32 %v308, %v603
      %v694 = vadd.f32 %v309, %v606
      %v695 = vadd.f32 %v310, %v611
      %v696 = vadd.f32 %v311, %v614
      %v697 = vadd.f32 %v312, %v619
      %v698 = vadd.f32 %v313, %v622
      %v699 = vadd.f32 %v314, %v627
      %v700 = vadd.f32 %v315, %v630
      %v701 = vadd.f32 %v316, %v635
      %v702 = vadd.f32 %v317, %v638
      %v703 = vadd.f32 %v318, %v643
      %v704 = vadd.f32 %v319, %v646
      %v705 = vadd.f32 %v320, %v651
      %v706 = vadd.f32 %v321, %v654
      %v707 = vadd.f32 %v322, %v659
      %v708 = vadd.f32 %v323, %v662
      %v709 = vadd.f32 %v324, %v667
      %v710 = vadd.f32 %v325, %v670
      %v711 = vadd.f32 %v326, %v675
      %v712 = vadd.f32 %v327, %v678
      %713 = vst [vmem:[#allocation2] sm:$0xff] %v681
      %714 = vst [vmem:[#allocation2 + $0x8] sm:$0xff] %v682
      %715 = vst [vmem:[#allocation2 + $0x10] sm:$0xff] %v683
      %716 = vst [vmem:[#allocation2 + $0x18] sm:$0xff] %v684
      %717 = vst [vmem:[#allocation2 + $0x20] sm:$0xff] %v685
      %718 = vst [vmem:[#allocation2 + $0x28] sm:$0xff] %v686
      %719 = vst [vmem:[#allocation2 + $0x30] sm:$0xff] %v687
      %720 = vst [vmem:[#allocation2 + $0x38] sm:$0xff] %v688
      %721 = vst [vmem:[#allocation2 + $0x40] sm:$0xff] %v689
      %722 = vst [vmem:[#allocation2 + $0x48] sm:$0xff] %v690
      %723 = vst [vmem:[#allocation2 + $0x50] sm:$0xff] %v691
      %724 = vst [vmem:[#allocation2 + $0x58] sm:$0xff] %v692
      %725 = vst [vmem:[#allocation2 + $0x60] sm:$0xff] %v693
      %726 = vst [vmem:[#allocation2 + $0x68] sm:$0xff] %v694
      %727 = vst [vmem:[#allocation2 + $0x70] sm:$0xff] %v695
      %728 = vst [vmem:[#allocation2 + $0x78] sm:$0xff] %v696
      %729 = vst [vmem:[#allocation2 + $0x80] sm:$0xff] %v697
      %730 = vst [vmem:[#allocation2 + $0x88] sm:$0xff] %v698
      %731 = vst [vmem:[#allocation2 + $0x90] sm:$0xff] %v699
      %732 = vst [vmem:[#allocation2 + $0x98] sm:$0xff] %v700
      %733 = vst [vmem:[#allocation2 + $0xa0] sm:$0xff] %v701
      %734 = vst [vmem:[#allocation2 + $0xa8] sm:$0xff] %v702
      %735 = vst [vmem:[#allocation2 + $0xb0] sm:$0xff] %v703
      %736 = vst [vmem:[#allocation2 + $0xb8] sm:$0xff] %v704
      %737 = vst [vmem:[#allocation2 + $0xc0] sm:$0xff] %v705
      %738 = vst [vmem:[#allocation2 + $0xc8] sm:$0xff] %v706
      %739 = vst [vmem:[#allocation2 + $0xd0] sm:$0xff] %v707
      %740 = vst [vmem:[#allocation2 + $0xd8] sm:$0xff] %v708
      %741 = vst [vmem:[#allocation2 + $0xe0] sm:$0xff] %v709
      %742 = vst [vmem:[#allocation2 + $0xe8] sm:$0xff] %v710
      %743 = vst [vmem:[#allocation2 + $0xf0] sm:$0xff] %v711
      %744 = vst [vmem:[#allocation2 + $0xf8] sm:$0xff] %v712
      // Predicated region
      $region37: #{vqvae_forward.9} parent=31 // pred_check
        %p745 = pneg %p260
      $region38: #{vqvae_forward.9} parent=31 // pred_check_branch
        %747 = sbr.rel (%p745) target = $region40
      $region39: #{vqvae_forward.9} parent=31 // pred_region
        %v748 = vld [vmem:[#allocation2] sm:$0xff]
        %v749 = vld [vmem:[#allocation2 + $0x8] sm:$0xff]
        %v750 = vld [vmem:[#allocation2 + $0x10] sm:$0xff]
        %v751 = vld [vmem:[#allocation2 + $0x18] sm:$0xff]
        %v752 = vld [vmem:[#allocation2 + $0x20] sm:$0xff]
        %v753 = vld [vmem:[#allocation2 + $0x28] sm:$0xff]
        %v754 = vld [vmem:[#allocation2 + $0x30] sm:$0xff]
        %v755 = vld [vmem:[#allocation2 + $0x38] sm:$0xff]
        %v756 = vld [vmem:[#allocation2 + $0x40] sm:$0xff]
        %v757 = vld [vmem:[#allocation2 + $0x48] sm:$0xff]
        %v758 = vld [vmem:[#allocation2 + $0x50] sm:$0xff]
        %v759 = vld [vmem:[#allocation2 + $0x58] sm:$0xff]
        %v760 = vld [vmem:[#allocation2 + $0x60] sm:$0xff]
        %v761 = vld [vmem:[#allocation2 + $0x68] sm:$0xff]
        %v762 = vld [vmem:[#allocation2 + $0x70] sm:$0xff]
        %v763 = vld [vmem:[#allocation2 + $0x78] sm:$0xff]
        %v764 = vld [vmem:[#allocation2 + $0x80] sm:$0xff]
        %v765 = vld [vmem:[#allocation2 + $0x88] sm:$0xff]
        %v766 = vld [vmem:[#allocation2 + $0x90] sm:$0xff]
        %v767 = vld [vmem:[#allocation2 + $0x98] sm:$0xff]
        %v768 = vld [vmem:[#allocation2 + $0xa0] sm:$0xff]
        %v769 = vld [vmem:[#allocation2 + $0xa8] sm:$0xff]
        %v770 = vld [vmem:[#allocation2 + $0xb0] sm:$0xff]
        %v771 = vld [vmem:[#allocation2 + $0xb8] sm:$0xff]
        %v772 = vld [vmem:[#allocation2 + $0xc0] sm:$0xff]
        %v773 = vld [vmem:[#allocation2 + $0xc8] sm:$0xff]
        %v774 = vld [vmem:[#allocation2 + $0xd0] sm:$0xff]
        %v775 = vld [vmem:[#allocation2 + $0xd8] sm:$0xff]
        %v776 = vld [vmem:[#allocation2 + $0xe0] sm:$0xff]
        %v777 = vld [vmem:[#allocation2 + $0xe8] sm:$0xff]
        %v778 = vld [vmem:[#allocation2 + $0xf0] sm:$0xff]
        %v779 = vld [vmem:[#allocation2 + $0xf8] sm:$0xff]
        %v780 = vld [vmem:[%s249] sm:$0x1]
        %v782 = vlaneseq
        %v783 = vshrl.u32 %v782, 7
        %v784 = vsub.s32 0, %v783
        %v785 = vrot.slane %v780, %v784
        %v787 = vadd.f32 %v748, %v785
        %v788 = vadd.f32 %v749, %v785
        %v789 = vadd.f32 %v750, %v785
        %v790 = vadd.f32 %v751, %v785
        %v791 = vadd.f32 %v752, %v785
        %v792 = vadd.f32 %v753, %v785
        %v793 = vadd.f32 %v754, %v785
        %v794 = vadd.f32 %v755, %v785
        %v795 = vadd.f32 %v756, %v785
        %v796 = vadd.f32 %v757, %v785
        %v797 = vadd.f32 %v758, %v785
        %v798 = vadd.f32 %v759, %v785
        %v799 = vadd.f32 %v760, %v785
        %v800 = vadd.f32 %v761, %v785
        %v801 = vadd.f32 %v762, %v785
        %v802 = vadd.f32 %v763, %v785
        %v803 = vadd.f32 %v764, %v785
        %v804 = vadd.f32 %v765, %v785
        %v805 = vadd.f32 %v766, %v785
        %v806 = vadd.f32 %v767, %v785
        %v807 = vadd.f32 %v768, %v785
        %v808 = vadd.f32 %v769, %v785
        %v809 = vadd.f32 %v770, %v785
        %v810 = vadd.f32 %v771, %v785
        %v811 = vadd.f32 %v772, %v785
        %v812 = vadd.f32 %v773, %v785
        %v813 = vadd.f32 %v774, %v785
        %v814 = vadd.f32 %v775, %v785
        %v815 = vadd.f32 %v776, %v785
        %v816 = vadd.f32 %v777, %v785
        %v817 = vadd.f32 %v778, %v785
        %v818 = vadd.f32 %v779, %v785
        %v819 = vtanh.pop %v787
        %v820 = vtanh.pop %v788
        %v821 = vtanh.pop %v789
        %v822 = vtanh.pop %v790
        %v823 = vtanh.pop %v791
        %v824 = vtanh.pop %v792
        %v825 = vtanh.pop %v793
        %v826 = vtanh.pop %v794
        %v827 = vtanh.pop %v795
        %v828 = vtanh.pop %v796
        %v829 = vtanh.pop %v797
        %v830 = vtanh.pop %v798
        %v831 = vtanh.pop %v799
        %v832 = vtanh.pop %v800
        %v833 = vtanh.pop %v801
        %v834 = vtanh.pop %v802
        %v835 = vtanh.pop %v803
        %v836 = vtanh.pop %v804
        %v837 = vtanh.pop %v805
        %v838 = vtanh.pop %v806
        %v839 = vtanh.pop %v807
        %v840 = vtanh.pop %v808
        %v841 = vtanh.pop %v809
        %v842 = vtanh.pop %v810
        %v843 = vtanh.pop %v811
        %v844 = vtanh.pop %v812
        %v845 = vtanh.pop %v813
        %v846 = vtanh.pop %v814
        %v847 = vtanh.pop %v815
        %v848 = vtanh.pop %v816
        %v849 = vtanh.pop %v817
        %v850 = vtanh.pop %v818
        %851 = vst [vmem:[%s257] sm:$0xff] %v819
        %852 = vst [vmem:[%s257 + $0x8] sm:$0xff] %v820
        %853 = vst [vmem:[%s257 + $0x10] sm:$0xff] %v821
        %854 = vst [vmem:[%s257 + $0x18] sm:$0xff] %v822
        %855 = vst [vmem:[%s257 + $0x20] sm:$0xff] %v823
        %856 = vst [vmem:[%s257 + $0x28] sm:$0xff] %v824
        %857 = vst [vmem:[%s257 + $0x30] sm:$0xff] %v825
        %858 = vst [vmem:[%s257 + $0x38] sm:$0xff] %v826
        %859 = vst [vmem:[%s257 + $0x40] sm:$0xff] %v827
        %860 = vst [vmem:[%s257 + $0x48] sm:$0xff] %v828
        %861 = vst [vmem:[%s257 + $0x50] sm:$0xff] %v829
        %862 = vst [vmem:[%s257 + $0x58] sm:$0xff] %v830
        %863 = vst [vmem:[%s257 + $0x60] sm:$0xff] %v831
        %864 = vst [vmem:[%s257 + $0x68] sm:$0xff] %v832
        %865 = vst [vmem:[%s257 + $0x70] sm:$0xff] %v833
        %866 = vst [vmem:[%s257 + $0x78] sm:$0xff] %v834
        %867 = vst [vmem:[%s257 + $0x80] sm:$0xff] %v835
        %868 = vst [vmem:[%s257 + $0x88] sm:$0xff] %v836
        %869 = vst [vmem:[%s257 + $0x90] sm:$0xff] %v837
        %870 = vst [vmem:[%s257 + $0x98] sm:$0xff] %v838
        %871 = vst [vmem:[%s257 + $0xa0] sm:$0xff] %v839
        %872 = vst [vmem:[%s257 + $0xa8] sm:$0xff] %v840
        %873 = vst [vmem:[%s257 + $0xb0] sm:$0xff] %v841
        %874 = vst [vmem:[%s257 + $0xb8] sm:$0xff] %v842
        %875 = vst [vmem:[%s257 + $0xc0] sm:$0xff] %v843
        %876 = vst [vmem:[%s257 + $0xc8] sm:$0xff] %v844
        %877 = vst [vmem:[%s257 + $0xd0] sm:$0xff] %v845
        %878 = vst [vmem:[%s257 + $0xd8] sm:$0xff] %v846
        %879 = vst [vmem:[%s257 + $0xe0] sm:$0xff] %v847
        %880 = vst [vmem:[%s257 + $0xe8] sm:$0xff] %v848
        %881 = vst [vmem:[%s257 + $0xf0] sm:$0xff] %v849
        %882 = vst [vmem:[%s257 + $0xf8] sm:$0xff] %v850
      $region40: #{vqvae_forward.9} parent=31 // pred_fallthru
        _
      %s883 = smul.u32 32, %s19
      %p884 = scmp.lt.s32.totalorder %s883, 63
      %s885 = scalar_select %p884, %s883, 63
      %p886 = scmp.lt.s32.totalorder %s20, 0
      %s887 = scalar_select %p886, %s20, 0
      %s888 = sadd.s32 %s887, %s885
      %s889 = smul.addr %s888, 8
      %s890 = scalar_lea.vmem %s3, %s889
      // Predicated region
      $region41: #{vqvae_forward.9} parent=31 // pred_check
        %p891 = pneg %p135
      $region42: #{vqvae_forward.9} parent=31 // pred_check_branch
        %893 = sbr.rel (%p891) target = $region44
      $region43: #{vqvae_forward.9} parent=31 // pred_region
        %s894 = smul.u32 32, %s19
      $region44: #{vqvae_forward.9} parent=31 // pred_fallthru
        _
    $region32: #{vqvae_forward.9} parent=5 // pred_fallthru
      _
    %p895 = scmp.le.s32.totalorder 2, %s9
    // Predicated region
    $region45: #{vqvae_forward.9} parent=5 // pred_check
      %p896 = pneg %p895
    $region46: #{vqvae_forward.9} parent=5 // pred_check_branch
      %898 = sbr.rel (%p896) target = $region48
    $region47: #{vqvae_forward.9} parent=5 // pred_region
      %s899 = ssub.s32 %s9, 2
      // Predicated region
      $region49: #{vqvae_forward.9} parent=47 // pred_check
        %p900 = pneg %p141
      $region50: #{vqvae_forward.9} parent=47 // pred_check_branch
        %902 = sbr.rel (%p900) target = $region52
      $region51: #{vqvae_forward.9} parent=47 // pred_region
        %s903 = smul.u32 32, %s22
        %p904 = scmp.lt.s32.totalorder %s903, 63
        %s905 = scalar_select %p904, %s903, 63
        %p906 = scmp.lt.s32.totalorder %s23, 0
        %s907 = scalar_select %p906, %s23, 0
        %s908 = sadd.s32 %s907, %s905
        %s909 = smul.addr %s908, 8
        %s910 = scalar_lea.vmem %s3, %s909
      $region52: #{vqvae_forward.9} parent=47 // pred_fallthru
        _
    $region48: #{vqvae_forward.9} parent=5 // pred_fallthru
      _
  $region6: #{vqvae_forward.9} parent=0 // loop_footer
    %s13 = sadd.s32 1, %s9
  $region7: #{vqvae_forward.9} parent=0 // loop_footer_branch
    %8 = sbr.rel target = $region3
  $region8: #{vqvae_forward.9} parent=0 // loop_exit
    _

</llo_original>
